<compile_context>
chip_gen: v7x
topology: tpu7x:2x2x1
jax: 0.10.0
libtpu: 0.0.40
codegen_flags: <defaults>
</compile_context>

<pallas_src>
import functools

import jax
import jax.numpy as jnp
from jax import lax
from jax.experimental import pallas as pl
from jax.experimental.pallas import tpu as pltpu


def _mha_kernel(x_ref, w_ref, b_ref, o_ref, *, n_batch, seq, heads, head_dim):
    """One head-group of fused-QKV multi-head attention.

    Layout: channels on sublanes, spatial tokens on lanes.

      x_ref : (B, C, S)      full (B, C, H*W) input
      w_ref : (3*Cg, C)      [Wq_g ; Wk_g ; Wv_g] rows for this head group
      b_ref : (3*Cg, 1)      matching bias column
      o_ref : (B, Cg, S)     this head group's output channels
    """
    cg = heads * head_dim
    w = w_ref[...]
    bias = b_ref[...]

    # Fused QKV projection: one (3Cg, C) @ (C, S) MXU matmul per batch element
    # (static unroll; B is small).  head_dim == 8 == one sublane group, so the
    # (3, heads, head_dim, S) split below is a tile-aligned view.
    q_parts, k_parts, v_parts = [], [], []
    for bi in range(n_batch):
        qkv = jnp.dot(w, x_ref[bi], preferred_element_type=jnp.float32) + bias
        qkv = qkv.reshape(3, heads, head_dim, seq)
        q_parts.append(qkv[0])
        k_parts.append(qkv[1])
        v_parts.append(qkv[2])

    # Fold batch and heads into ONE dot_general batch dim: G = n_batch * heads.
    q = jnp.concatenate(q_parts, axis=0)            # (G, dh, S)
    k = jnp.concatenate(k_parts, axis=0)            # (G, dh, S)
    v = jnp.concatenate(v_parts, axis=0)            # (G, dh, S)

    # scores[g, i, j] = q_i . k_j  (NOTE: the reference module applies NO
    # 1/sqrt(dh) scale).  Two tiny minor-dim swaps put head_dim last so both
    # attention matmuls use the contract-last-dims batched form.
    qt = jnp.transpose(q, (0, 2, 1))                # (G, S, dh)
    kt = jnp.transpose(k, (0, 2, 1))                # (G, S, dh)
    scores = lax.dot_general(
        qt, kt, (((2,), (2,)), ((0,), (0,))),
        preferred_element_type=jnp.float32)         # (G, S_i, S_j)

    # Numerically stable softmax along the lane (key) axis; exact reciprocal
    # (the EUP is idle at these sizes, exactness keeps the tolerance tight).
    m = jnp.max(scores, axis=-1, keepdims=True)     # (G, S_i, 1)
    e = jnp.exp(scores - m)
    denom = jnp.sum(e, axis=-1, keepdims=True)      # (G, S_i, 1)
    # Normalizing the (S, S) probabilities costs only ~G*S*S extra VPU mults at
    # these shapes (noise); the flash-tiled path for large S (see module TODO)
    # folds the normalization into the (dh, S) accumulator instead.
    p = e * pl.reciprocal(denom, approx=False)      # (G, S_i, S_j)

    # ctx[g, d, i] = sum_j v[g, d, j] * p[g, i, j]  -> channels land back on
    # sublanes, so no output-side transpose is needed before the store.
    ctx = lax.dot_general(
        v, p, (((2,), (2,)), ((0,), (0,))),
        preferred_element_type=jnp.float32)         # (G, dh, S_i)

    o_ref[...] = ctx.reshape(n_batch, cg, seq).astype(o_ref.dtype)


def _num_tensorcores_per_chip():
    """Robust TensorCore-per-chip count (drives the head-group grid split on
    multi-core chips such as v7x).  Falls back to 1 (always correct)."""
    try:
        info = pltpu.get_tpu_info()
        for name in ("num_cores", "num_tensorcores", "tensor_cores_per_chip",
                     "cores_per_chip", "num_cores_per_chip"):
            val = getattr(info, name, None)
            if val:
                return int(val)
    except Exception:
        pass
    try:
        for name in ("num_cores", "core_count"):
            val = getattr(jax.devices()[0], name, None)
            if val:
                return int(val)
    except Exception:
        pass
    return 1


def prepare_qkv_params(params, hidden_size, num_heads, num_head_groups):
    """Pack the three Conv2d(hidden, hidden, 1) weights into a single fused,
    head-group-major (3C, C) operand + (3C, 1) bias column.

    Done once at parameter-load time (hoisted out of the forward pass)."""
    C = hidden_size
    dh = C // num_heads
    cg = (num_heads // num_head_groups) * dh
    wq, bq, wk, bk, wv, bv = params
    w = jnp.stack([wq.reshape(C, C), wk.reshape(C, C), wv.reshape(C, C)])   # (3, C, C)
    w = w.reshape(3, num_head_groups, cg, C)
    wqkv = jnp.transpose(w, (1, 0, 2, 3)).reshape(3 * C, C)                 # group-major
    b = jnp.stack([bq, bk, bv]).reshape(3, num_head_groups, cg)
    bqkv = jnp.transpose(b, (1, 0, 2)).reshape(3 * C, 1)
    return wqkv, bqkv


def transformer_forward(x_nchw, wqkv, bqkv, *, num_heads, num_head_groups):
    """x_nchw: (B, C, H, W) float32 -> (B, C, H, W) float32."""
    B, C, H, W = x_nchw.shape
    S = H * W
    head_dim = C // num_heads
    heads_per_group = num_heads // num_head_groups
    cg = heads_per_group * head_dim

    # NCHW is already channels-on-sublanes / tokens-on-lanes once the spatial
    # dims are merged: free reshapes on both sides, no relayout transposes.
    x = x_nchw.reshape(B, C, S)

    kernel = functools.partial(_mha_kernel, n_batch=B, seq=S,
                               heads=heads_per_group, head_dim=head_dim)

    out = pl.pallas_call(
        kernel,
        out_shape=jax.ShapeDtypeStruct((B, C, S), jnp.float32),
        grid_spec=pltpu.PrefetchScalarGridSpec(
            num_scalar_prefetch=0,
            grid=(num_head_groups,),
            in_specs=[
                pl.BlockSpec((B, C, S), lambda g: (0, 0, 0)),
                pl.BlockSpec((3 * cg, C), lambda g: (g, 0)),
                pl.BlockSpec((3 * cg, 1), lambda g: (g, 0)),
            ],
            out_specs=pl.BlockSpec((B, cg, S), lambda g: (0, g, 0)),
        ),
        compiler_params=pltpu.CompilerParams(
            dimension_semantics=("parallel",)),
    )(x, wqkv, bqkv)

    return out.reshape(B, C, H, W)


def _reference_forward(x_nchw, params, num_heads):
    """Pure-JAX mirror of the PyTorch forward (for verification)."""
    B, C, H, W = x_nchw.shape
    S = H * W
    dh = C // num_heads
    wq, bq, wk, bk, wv, bv = params
    x = x_nchw.reshape(B, C, S)

    def proj(w, b):
        y = jnp.einsum('oc,bcs->bos', w.reshape(C, C), x) + b[None, :, None]
        return y.reshape(B, num_heads, dh, S)

    q = proj(wq, bq)
    k = proj(wk, bk)
    v = proj(wv, bv)
    scores = jnp.einsum('bndi,bndj->bnij', q, k)          # no 1/sqrt(dh) scale
    probs = jax.nn.softmax(scores, axis=-1)
    ctx = jnp.einsum('bnij,bndj->bndi', probs, v)          # (B, nh, dh, S)
    return ctx.reshape(B, C, H, W)


if __name__ == "__main__":
    # Small shapes consistent with the module: hidden_size=32, 4 heads
    # (head_dim=8), 8x8 spatial map, batch 2.
    B, C, H, W = 2, 32, 8, 8
    num_heads = 4

    key = jax.random.PRNGKey(0)
    kx, kq, kbq, kk, kbk, kv, kbv = jax.random.split(key, 7)

    x = jax.random.normal(kx, (B, C, H, W), dtype=jnp.float32)

    # Conv2d(hidden, hidden, 1)-shaped parameters, deterministic init.
    scale = 1.0 / (C ** 0.5)
    wq = jax.random.uniform(kq, (C, C, 1, 1), jnp.float32, -scale, scale)
    bq = jax.random.uniform(kbq, (C,), jnp.float32, -scale, scale)
    wk = jax.random.uniform(kk, (C, C, 1, 1), jnp.float32, -scale, scale)
    bk = jax.random.uniform(kbk, (C,), jnp.float32, -scale, scale)
    wv = jax.random.uniform(kv, (C, C, 1, 1), jnp.float32, -scale, scale)
    bv = jax.random.uniform(kbv, (C,), jnp.float32, -scale, scale)
    params = (wq, bq, wk, bk, wv, bv)

    # Head-group split sized to the TensorCore count (1 on v5e/v6e, 2 on v7x).
    n_tc = _num_tensorcores_per_chip()
    num_head_groups = n_tc if (n_tc > 1 and num_heads % n_tc == 0) else 1

    # Fused-QKV packing hoisted out of the forward pass (done once).
    wqkv, bqkv = prepare_qkv_params(params, C, num_heads, num_head_groups)

    fwd = jax.jit(functools.partial(transformer_forward, num_heads=num_heads,
                                    num_head_groups=num_head_groups))
    out = jax.block_until_ready(fwd(x, wqkv, bqkv))

    ref = jax.block_until_ready(_reference_forward(x, params, num_heads))
    assert out.shape == (B, C, H, W), out.shape
    max_err = float(jnp.max(jnp.abs(out - ref)))
    assert jnp.allclose(out, ref, atol=2e-4, rtol=2e-4), (
        f"mismatch vs reference (max abs err {max_err})")

    print("KERNEL_OK")
</pallas_src>

<mosaic_0001>
module attributes {stable_mosaic.version = 11 : i64} {
  func.func @_mha_kernel(%arg0: i32, %arg1: memref<2x32x64xf32, #tpu.memory_space<vmem>>, %arg2: memref<96x32xf32, #tpu.memory_space<vmem>>, %arg3: memref<96x1xf32, #tpu.memory_space<vmem>>, %arg4: memref<2x32x64xf32, #tpu.memory_space<vmem>>) attributes {dimension_semantics = [#tpu.dimension_semantics<parallel>], iteration_bounds = array<i64: 1>, scalar_prefetch = 0 : i64, scratch_operands = 0 : i64, tpu.core_type = #tpu.core_type<tc>, window_params = [{pipeline_mode = #tpu.pipeline_mode<synchronous>, transform_indices = @transform_0, window_bounds = array<i64: 2, 32, 64>}, {transform_indices = @transform_1, window_bounds = array<i64: 96, 32>}, {transform_indices = @transform_2, window_bounds = array<i64: 96, 1>}, {transform_indices = @transform_3, window_bounds = array<i64: 2, 32, 64>}]} {
    %c0 = arith.constant 0 : index
    %c0_0 = arith.constant 0 : index
    %0 = vector.load %arg2[%c0, %c0_0] : memref<96x32xf32, #tpu.memory_space<vmem>>, vector<96x32xf32>
    %c0_1 = arith.constant 0 : index
    %c0_2 = arith.constant 0 : index
    %1 = vector.load %arg3[%c0_1, %c0_2] : memref<96x1xf32, #tpu.memory_space<vmem>>, vector<96x1xf32>
    %c0_3 = arith.constant 0 : index
    %c0_4 = arith.constant 0 : index
    %c0_5 = arith.constant 0 : index
    %2 = vector.load %arg1[%c0_3, %c0_4, %c0_5] : memref<2x32x64xf32, #tpu.memory_space<vmem>>, vector<1x32x64xf32>
    %3 = vector.shape_cast %2 : vector<1x32x64xf32> to vector<32x64xf32>
    %cst = arith.constant dense<0.000000e+00> : vector<96x64xf32>
    %4 = tpu.matmul %0, %3, %cst {dimension_numbers = #tpu.dot_dimension_numbers<[1], [0], [0], [1], [0, 0, 1, 1], [], []>} : vector<96x32xf32>, vector<32x64xf32>, vector<96x64xf32> -> vector<96x64xf32>
    %5 = vector.broadcast %1 : vector<96x1xf32> to vector<96x64xf32>
    %6 = arith.addf %4, %5 : vector<96x64xf32>
    %7 = vector.shape_cast %6 : vector<96x64xf32> to vector<3x4x8x64xf32>
    %8 = vector.extract_strided_slice %7 {offsets = [0, 0, 0, 0], sizes = [1, 4, 8, 64], strides = [1, 1, 1, 1]} : vector<3x4x8x64xf32> to vector<1x4x8x64xf32>
    %9 = vector.shape_cast %8 : vector<1x4x8x64xf32> to vector<4x8x64xf32>
    %10 = vector.extract_strided_slice %7 {offsets = [1, 0, 0, 0], sizes = [1, 4, 8, 64], strides = [1, 1, 1, 1]} : vector<3x4x8x64xf32> to vector<1x4x8x64xf32>
    %11 = vector.shape_cast %10 : vector<1x4x8x64xf32> to vector<4x8x64xf32>
    %12 = vector.extract_strided_slice %7 {offsets = [2, 0, 0, 0], sizes = [1, 4, 8, 64], strides = [1, 1, 1, 1]} : vector<3x4x8x64xf32> to vector<1x4x8x64xf32>
    %13 = vector.shape_cast %12 : vector<1x4x8x64xf32> to vector<4x8x64xf32>
    %c1 = arith.constant 1 : index
    %c0_6 = arith.constant 0 : index
    %c0_7 = arith.constant 0 : index
    %14 = vector.load %arg1[%c1, %c0_6, %c0_7] : memref<2x32x64xf32, #tpu.memory_space<vmem>>, vector<1x32x64xf32>
    %15 = vector.shape_cast %14 : vector<1x32x64xf32> to vector<32x64xf32>
    %cst_8 = arith.constant dense<0.000000e+00> : vector<96x64xf32>
    %16 = tpu.matmul %0, %15, %cst_8 {dimension_numbers = #tpu.dot_dimension_numbers<[1], [0], [0], [1], [0, 0, 1, 1], [], []>} : vector<96x32xf32>, vector<32x64xf32>, vector<96x64xf32> -> vector<96x64xf32>
    %17 = vector.broadcast %1 : vector<96x1xf32> to vector<96x64xf32>
    %18 = arith.addf %16, %17 : vector<96x64xf32>
    %19 = vector.shape_cast %18 : vector<96x64xf32> to vector<3x4x8x64xf32>
    %20 = vector.extract_strided_slice %19 {offsets = [0, 0, 0, 0], sizes = [1, 4, 8, 64], strides = [1, 1, 1, 1]} : vector<3x4x8x64xf32> to vector<1x4x8x64xf32>
    %21 = vector.shape_cast %20 : vector<1x4x8x64xf32> to vector<4x8x64xf32>
    %22 = vector.extract_strided_slice %19 {offsets = [1, 0, 0, 0], sizes = [1, 4, 8, 64], strides = [1, 1, 1, 1]} : vector<3x4x8x64xf32> to vector<1x4x8x64xf32>
    %23 = vector.shape_cast %22 : vector<1x4x8x64xf32> to vector<4x8x64xf32>
    %24 = vector.extract_strided_slice %19 {offsets = [2, 0, 0, 0], sizes = [1, 4, 8, 64], strides = [1, 1, 1, 1]} : vector<3x4x8x64xf32> to vector<1x4x8x64xf32>
    %25 = vector.shape_cast %24 : vector<1x4x8x64xf32> to vector<4x8x64xf32>
    %26 = tpu.concatenate %9, %21 in 0 : vector<4x8x64xf32>, vector<4x8x64xf32> -> vector<8x8x64xf32>
    %27 = tpu.concatenate %11, %23 in 0 : vector<4x8x64xf32>, vector<4x8x64xf32> -> vector<8x8x64xf32>
    %28 = tpu.concatenate %13, %25 in 0 : vector<4x8x64xf32>, vector<4x8x64xf32> -> vector<8x8x64xf32>
    %29 = tpu.transpose %26, [0, 2, 1] : vector<8x8x64xf32> -> vector<8x64x8xf32>
    %30 = tpu.transpose %27, [0, 2, 1] : vector<8x8x64xf32> -> vector<8x64x8xf32>
    %cst_9 = arith.constant dense<0.000000e+00> : vector<8x64x64xf32>
    %31 = tpu.matmul %29, %30, %cst_9 {dimension_numbers = #tpu.dot_dimension_numbers<[2], [2], [1], [1], [0, 0, 0, 1, 1, 1], [0], [0]>} : vector<8x64x8xf32>, vector<8x64x8xf32>, vector<8x64x64xf32> -> vector<8x64x64xf32>
    %cst_10 = arith.constant dense<0xFF800000> : vector<8x64xf32>
    %32 = vector.multi_reduction <maximumf>, %31, %cst_10 [2] : vector<8x64x64xf32> to vector<8x64xf32>
    %33 = vector.shape_cast %32 : vector<8x64xf32> to vector<8x64x1xf32>
    %34 = vector.broadcast %33 : vector<8x64x1xf32> to vector<8x64x64xf32>
    %35 = arith.subf %31, %34 : vector<8x64x64xf32>
    %36 = math.exp %35 : vector<8x64x64xf32>
    %cst_11 = arith.constant dense<0.000000e+00> : vector<8x64xf32>
    %37 = vector.multi_reduction <add>, %36, %cst_11 [2] : vector<8x64x64xf32> to vector<8x64xf32>
    %38 = vector.shape_cast %37 : vector<8x64xf32> to vector<8x64x1xf32>
    %39 = tpu.reciprocal %38 : vector<8x64x1xf32> -> vector<8x64x1xf32>
    %40 = vector.broadcast %39 : vector<8x64x1xf32> to vector<8x64x64xf32>
    %41 = arith.mulf %36, %40 : vector<8x64x64xf32>
    %cst_12 = arith.constant dense<0.000000e+00> : vector<8x8x64xf32>
    %42 = tpu.matmul %28, %41, %cst_12 {dimension_numbers = #tpu.dot_dimension_numbers<[2], [2], [1], [1], [0, 0, 0, 1, 1, 1], [0], [0]>} : vector<8x8x64xf32>, vector<8x64x64xf32>, vector<8x8x64xf32> -> vector<8x8x64xf32>
    %43 = vector.shape_cast %42 : vector<8x8x64xf32> to vector<2x32x64xf32>
    %c0_13 = arith.constant 0 : index
    %c0_14 = arith.constant 0 : index
    %c0_15 = arith.constant 0 : index
    %44 = vector.load %arg4[%c0_13, %c0_14, %c0_15] : memref<2x32x64xf32, #tpu.memory_space<vmem>>, vector<2x32x64xf32>
    tpu.vector_store %arg4[%c0_13, %c0_14, %c0_15], %43 {strides = array<i32>} : memref<2x32x64xf32, #tpu.memory_space<vmem>>, vector<2x32x64xf32>,
    return
  }
  func.func @transform_0(%arg0: i32) -> (i32, i32, i32) {
    %c0_i32 = arith.constant 0 : i32
    %c0_i32_0 = arith.constant 0 : i32
    %c0_i32_1 = arith.constant 0 : i32
    %c0_i32_2 = arith.constant 0 : i32
    return %c0_i32, %c0_i32_0, %c0_i32_1 : i32, i32, i32
  }
  func.func @transform_1(%arg0: i32) -> (i32, i32) {
    %c0_i32 = arith.constant 0 : i32
    %c0_i32_0 = arith.constant 0 : i32
    return %arg0, %c0_i32 : i32, i32
  }
  func.func @transform_2(%arg0: i32) -> (i32, i32) {
    %c0_i32 = arith.constant 0 : i32
    %c0_i32_0 = arith.constant 0 : i32
    return %arg0, %c0_i32 : i32, i32
  }
  func.func @transform_3(%arg0: i32) -> (i32, i32, i32) {
    %c0_i32 = arith.constant 0 : i32
    %c0_i32_0 = arith.constant 0 : i32
    %c0_i32_1 = arith.constant 0 : i32
    return %c0_i32, %arg0, %c0_i32_0 : i32, i32, i32
  }
}

</mosaic_0001>

<llo_original>
// kernel: transformer_forward.1
$region0: #{transformer_forward.1}
  #allocation0 [shape = 'u32[]', space=smem, size = 0x4, offset = 0x4, fixed_abs, tag = 'smem constant byte address 0x4 - core index']
  #allocation1 [shape = 'u32[144,128]{1,0:T(1,128)}', space=vmem, size = 0x12000, scoped, tag = 'internal scratch']
  %s0 = inlined_call_operand.vmem [shape: f32[2,32,64], index: 0, kind: input, shape index: {}]
  %s1 = inlined_call_operand.vmem [shape: f32[96,32], index: 1, kind: input, shape index: {}]
  %s2 = inlined_call_operand.vmem [shape: f32[96,1], index: 2, kind: input, shape index: {}]
  %s3 = inlined_call_operand.vmem [shape: f32[2,32,64], index: 3, kind: output, shape index: {}]
  %s4 = sld [smem:[#allocation0]]
  $region22: #{transformer_forward.1} parent=0
    _
  %s6 = ssub.s32 1, %s4
  %s7 = scalar_select 0, %s6, %s4
  // Predicated region
  $region2: #{transformer_forward.1} parent=0 // pred_check
    _
  $region3: #{transformer_forward.1} parent=0 // pred_check_branch
    %9 = sbr.rel (0) target = $region5
  $region4: #{transformer_forward.1} parent=0 // pred_region
    _
  $region5: #{transformer_forward.1} parent=0 // pred_fallthru
    _
  // Predicated region
  $region6: #{transformer_forward.1} parent=0 // pred_check
    _
  $region7: #{transformer_forward.1} parent=0 // pred_check_branch
    %11 = sbr.rel (0) target = $region9
  $region8: #{transformer_forward.1} parent=0 // pred_region
    _
  $region9: #{transformer_forward.1} parent=0 // pred_fallthru
    _
  // Predicated region
  $region10: #{transformer_forward.1} parent=0 // pred_check
    _
  $region11: #{transformer_forward.1} parent=0 // pred_check_branch
    %13 = sbr.rel (0) target = $region13
  $region12: #{transformer_forward.1} parent=0 // pred_region
    _
  $region13: #{transformer_forward.1} parent=0 // pred_fallthru
    _
  %v14 = vld [vmem:[%s1] sm:$0xff]
  %v15 = vld [vmem:[%s1 + $0x8] sm:$0xff]
  %v16 = vld [vmem:[%s1 + $0x10] sm:$0xff]
  %v17 = vld [vmem:[%s1 + $0x18] sm:$0xff]
  %v18 = vld [vmem:[%s1 + $0x20] sm:$0xff]
  %v19 = vld [vmem:[%s1 + $0x28] sm:$0xff]
  %v20 = vld [vmem:[%s1 + $0x30] sm:$0xff]
  %v21 = vld [vmem:[%s1 + $0x38] sm:$0xff]
  %v22 = vld [vmem:[%s1 + $0x40] sm:$0xff]
  %v23 = vld [vmem:[%s1 + $0x48] sm:$0xff]
  %v24 = vld [vmem:[%s1 + $0x50] sm:$0xff]
  %v25 = vld [vmem:[%s1 + $0x58] sm:$0xff]
  %v26 = vld [vmem:[%s2] sm:$0xff]
  %v27 = vld [vmem:[%s2 + $0x8] sm:$0xff]
  %v28 = vld [vmem:[%s2 + $0x10] sm:$0xff]
  %v29 = vld [vmem:[%s2 + $0x18] sm:$0xff]
  %v30 = vld [vmem:[%s2 + $0x20] sm:$0xff]
  %v31 = vld [vmem:[%s2 + $0x28] sm:$0xff]
  %v32 = vld [vmem:[%s2 + $0x30] sm:$0xff]
  %v33 = vld [vmem:[%s2 + $0x38] sm:$0xff]
  %v34 = vld [vmem:[%s2 + $0x40] sm:$0xff]
  %v35 = vld [vmem:[%s2 + $0x48] sm:$0xff]
  %v36 = vld [vmem:[%s2 + $0x50] sm:$0xff]
  %v37 = vld [vmem:[%s2 + $0x58] sm:$0xff]
  %v38 = vld [vmem:[%s0] sm:$0xff]
  %v39 = vld [vmem:[%s0 + $0x8] sm:$0xff]
  %v40 = vld [vmem:[%s0 + $0x10] sm:$0xff]
  %v41 = vld [vmem:[%s0 + $0x18] sm:$0xff]
  %43 = vset.pattern.permute.xlu0 0
  %44 = vperm.xlu0 %43, %v26
  %v45 = vpop.permute.xlu0 %44
  %48 = vset.pattern.permute.xlu0 0
  %49 = vperm.xlu0 %48, %v27
  %v50 = vpop.permute.xlu0 %49
  %53 = vset.pattern.permute.xlu0 0
  %54 = vperm.xlu0 %53, %v28
  %v55 = vpop.permute.xlu0 %54
  %58 = vset.pattern.permute.xlu0 0
  %59 = vperm.xlu0 %58, %v29
  %v60 = vpop.permute.xlu0 %59
  %63 = vset.pattern.permute.xlu0 0
  %64 = vperm.xlu0 %63, %v30
  %v65 = vpop.permute.xlu0 %64
  %68 = vset.pattern.permute.xlu0 0
  %69 = vperm.xlu0 %68, %v31
  %v70 = vpop.permute.xlu0 %69
  %73 = vset.pattern.permute.xlu0 0
  %74 = vperm.xlu0 %73, %v32
  %v75 = vpop.permute.xlu0 %74
  %78 = vset.pattern.permute.xlu0 0
  %79 = vperm.xlu0 %78, %v33
  %v80 = vpop.permute.xlu0 %79
  %83 = vset.pattern.permute.xlu0 0
  %84 = vperm.xlu0 %83, %v34
  %v85 = vpop.permute.xlu0 %84
  %88 = vset.pattern.permute.xlu0 0
  %89 = vperm.xlu0 %88, %v35
  %v90 = vpop.permute.xlu0 %89
  %93 = vset.pattern.permute.xlu0 0
  %94 = vperm.xlu0 %93, %v36
  %v95 = vpop.permute.xlu0 %94
  %98 = vset.pattern.permute.xlu0 0
  %99 = vperm.xlu0 %98, %v37
  %v100 = vpop.permute.xlu0 %99
  %vm102 = vcmask 261120
  %v104 = vsel %vm102, %v14, 0
  %v107 = vsel %vm102, %v15, 0
  %v110 = vsel %vm102, %v16, 0
  %v113 = vsel %vm102, %v17, 0
  %v116 = vsel %vm102, %v18, 0
  %v119 = vsel %vm102, %v19, 0
  %v122 = vsel %vm102, %v20, 0
  %v125 = vsel %vm102, %v21, 0
  %v128 = vsel %vm102, %v22, 0
  %v131 = vsel %vm102, %v23, 0
  %v134 = vsel %vm102, %v24, 0
  %v137 = vsel %vm102, %v25, 0
  %139 = vmatprep.subr.mxu0 0.0
  %140 = vmatpush1.msra.mxu0 %v38
  %141 = vmatprep.subr.mxu0 0.0
  %142 = vmatpush1.msra.mxu0 %v39
  %143 = vmatprep.subr.mxu0 0.0
  %144 = vmatpush1.msra.mxu0 %v40
  %145 = vmatprep.subr.mxu0 0.0
  %146 = vmatpush1.msra.mxu0 %v41
  %147 = vmatprep.subr.mxu0 0.0
  %148 = vmatpush1.msra.mxu0 0.0
  %149 = vmatprep.subr.mxu0 0.0
  %150 = vmatpush1.msra.mxu0 0.0
  %151 = vmatprep.subr.mxu0 0.0
  %152 = vmatpush1.msra.mxu0 0.0
  %153 = vmatprep.subr.mxu0 0.0
  %154 = vmatpush1.msra.mxu0 0.0
  %155 = vmatprep.subr.mxu0 0.0
  %156 = vmatpush1.msra.mxu0 0.0
  %157 = vmatprep.subr.mxu0 0.0
  %158 = vmatpush1.msra.mxu0 0.0
  %159 = vmatprep.subr.mxu0 0.0
  %160 = vmatpush1.msra.mxu0 0.0
  %161 = vmatprep.subr.mxu0 0.0
  %162 = vmatpush1.msra.mxu0 0.0
  %163 = vmatprep.subr.mxu0 0.0
  %164 = vmatpush1.msra.mxu0 0.0
  %165 = vmatprep.subr.mxu0 0.0
  %166 = vmatpush1.msra.mxu0 0.0
  %167 = vmatprep.subr.mxu0 0.0
  %168 = vmatpush1.msra.mxu0 0.0
  %169 = vmatprep.subr.mxu0 0.0
  %170 = vmatpush1.msra.mxu0 0.0
  %171 = vmatprep.subr.mxu0 0.0
  %172 = vmatpush1.msra.mxu0 0.0
  %173 = vmatprep.subr.mxu0 0.0
  %174 = vmatpush1.msra.mxu0 0.0
  %175 = vmatprep.subr.mxu0 0.0
  %176 = vmatpush1.msra.mxu0 0.0
  %177 = vmatprep.subr.mxu0 0.0
  %178 = vmatpush1.msra.mxu0 0.0
  %179 = vmatprep.subr.mxu0 0.0
  %180 = vmatpush1.msra.mxu0 0.0
  %181 = vmatprep.subr.mxu0 0.0
  %182 = vmatpush1.msra.mxu0 0.0
  %183 = vmatprep.subr.mxu0 0.0
  %184 = vmatpush1.msra.mxu0 0.0
  %185 = vmatprep.subr.mxu0 0.0
  %186 = vmatpush1.msra.mxu0 0.0
  %187 = vmatprep.subr.mxu0 0.0
  %188 = vmatpush1.msra.mxu0 0.0
  %189 = vmatprep.subr.mxu0 0.0
  %190 = vmatpush1.msra.mxu0 0.0
  %191 = vmatprep.subr.mxu0 0.0
  %192 = vmatpush1.msra.mxu0 0.0
  %193 = vmatprep.subr.mxu0 0.0
  %194 = vmatpush1.msra.mxu0 0.0
  %195 = vmatprep.subr.mxu0 0.0
  %196 = vmatpush1.msra.mxu0 0.0
  %197 = vmatprep.subr.mxu0 0.0
  %198 = vmatpush1.msra.mxu0 0.0
  %199 = vmatprep.subr.mxu0 0.0
  %200 = vmatpush1.msra.mxu0 0.0
  %201 = vmatprep.subr.mxu0 0.0
  %202 = vmatpush1.msra.mxu0 0.0
  %203 = vmatprep.mubr.f32.mxu0 0.0
  %204 = vmatmul.mubr.f32.gmra.mrb[0].mxu0 %v104
  %v205 = vpop.f32.mrb[0].mxu0
  %v206 = vadd.f32 %v45, %v205
  %v207 = vpop.f32.mrb[0].mxu0
  %208 = vmatprep.mubr.f32.mxu0 0.0
  %209 = vmatmul.mubr.f32.gmra.mrb[0].mxu0 %v107
  %v210 = vpop.f32.mrb[0].mxu0
  %v211 = vadd.f32 %v50, %v210
  %v212 = vpop.f32.mrb[0].mxu0
  %213 = vmatprep.mubr.f32.mxu0 0.0
  %214 = vmatmul.mubr.f32.gmra.mrb[0].mxu0 %v110
  %v215 = vpop.f32.mrb[0].mxu0
  %v216 = vadd.f32 %v55, %v215
  %v217 = vpop.f32.mrb[0].mxu0
  %218 = vmatprep.mubr.f32.mxu0 0.0
  %219 = vmatmul.mubr.f32.gmra.mrb[0].mxu0 %v113
  %v220 = vpop.f32.mrb[0].mxu0
  %v221 = vadd.f32 %v60, %v220
  %v222 = vpop.f32.mrb[0].mxu0
  %223 = vmatprep.mubr.f32.mxu0 0.0
  %224 = vmatmul.mubr.f32.gmra.mrb[0].mxu0 %v116
  %v225 = vpop.f32.mrb[0].mxu0
  %v226 = vadd.f32 %v65, %v225
  %v227 = vpop.f32.mrb[0].mxu0
  %228 = vmatprep.mubr.f32.mxu0 0.0
  %229 = vmatmul.mubr.f32.gmra.mrb[0].mxu0 %v119
  %v230 = vpop.f32.mrb[0].mxu0
  %v231 = vadd.f32 %v70, %v230
  %v232 = vpop.f32.mrb[0].mxu0
  %233 = vmatprep.mubr.f32.mxu0 0.0
  %234 = vmatmul.mubr.f32.gmra.mrb[0].mxu0 %v122
  %v235 = vpop.f32.mrb[0].mxu0
  %v236 = vadd.f32 %v75, %v235
  %v237 = vpop.f32.mrb[0].mxu0
  %238 = vmatprep.mubr.f32.mxu0 0.0
  %239 = vmatmul.mubr.f32.gmra.mrb[0].mxu0 %v125
  %v240 = vpop.f32.mrb[0].mxu0
  %v241 = vadd.f32 %v80, %v240
  %v242 = vpop.f32.mrb[0].mxu0
  %243 = vmatprep.mubr.f32.mxu0 0.0
  %244 = vmatmul.mubr.f32.gmra.mrb[0].mxu0 %v128
  %v245 = vpop.f32.mrb[0].mxu0
  %v246 = vadd.f32 %v85, %v245
  %v247 = vpop.f32.mrb[0].mxu0
  %248 = vmatprep.mubr.f32.mxu0 0.0
  %249 = vmatmul.mubr.f32.gmra.mrb[0].mxu0 %v131
  %v250 = vpop.f32.mrb[0].mxu0
  %v251 = vadd.f32 %v90, %v250
  %v252 = vpop.f32.mrb[0].mxu0
  %253 = vmatprep.mubr.f32.mxu0 0.0
  %254 = vmatmul.mubr.f32.gmra.mrb[0].mxu0 %v134
  %v255 = vpop.f32.mrb[0].mxu0
  %v256 = vadd.f32 %v95, %v255
  %v257 = vpop.f32.mrb[0].mxu0
  %258 = vmatprep.mubr.f32.mxu0 0.0
  %259 = vmatmul.mubr.f32.gmra.mrb[0].mxu0 %v137
  %v260 = vpop.f32.mrb[0].mxu0
  %v261 = vadd.f32 %v100, %v260
  %v262 = vpop.f32.mrb[0].mxu0
  %263 = vdwg.mxu0
  %s264 = scalar_lea.vmem %s0, 32
  %v265 = vld [vmem:[%s264] sm:$0xff]
  %v266 = vld [vmem:[%s264 + $0x8] sm:$0xff]
  %v267 = vld [vmem:[%s264 + $0x10] sm:$0xff]
  %v268 = vld [vmem:[%s264 + $0x18] sm:$0xff]
  %269 = vmatprep.subr.mxu0 0.0
  %270 = vmatpush1.msra.mxu0 %v265
  %271 = vmatprep.subr.mxu0 0.0
  %272 = vmatpush1.msra.mxu0 %v266
  %273 = vmatprep.subr.mxu0 0.0
  %274 = vmatpush1.msra.mxu0 %v267
  %275 = vmatprep.subr.mxu0 0.0
  %276 = vmatpush1.msra.mxu0 %v268
  %277 = vmatprep.subr.mxu0 0.0
  %278 = vmatpush1.msra.mxu0 0.0
  %279 = vmatprep.subr.mxu0 0.0
  %280 = vmatpush1.msra.mxu0 0.0
  %281 = vmatprep.subr.mxu0 0.0
  %282 = vmatpush1.msra.mxu0 0.0
  %283 = vmatprep.subr.mxu0 0.0
  %284 = vmatpush1.msra.mxu0 0.0
  %285 = vmatprep.subr.mxu0 0.0
  %286 = vmatpush1.msra.mxu0 0.0
  %287 = vmatprep.subr.mxu0 0.0
  %288 = vmatpush1.msra.mxu0 0.0
  %289 = vmatprep.subr.mxu0 0.0
  %290 = vmatpush1.msra.mxu0 0.0
  %291 = vmatprep.subr.mxu0 0.0
  %292 = vmatpush1.msra.mxu0 0.0
  %293 = vmatprep.subr.mxu0 0.0
  %294 = vmatpush1.msra.mxu0 0.0
  %295 = vmatprep.subr.mxu0 0.0
  %296 = vmatpush1.msra.mxu0 0.0
  %297 = vmatprep.subr.mxu0 0.0
  %298 = vmatpush1.msra.mxu0 0.0
  %299 = vmatprep.subr.mxu0 0.0
  %300 = vmatpush1.msra.mxu0 0.0
  %301 = vmatprep.subr.mxu0 0.0
  %302 = vmatpush1.msra.mxu0 0.0
  %303 = vmatprep.subr.mxu0 0.0
  %304 = vmatpush1.msra.mxu0 0.0
  %305 = vmatprep.subr.mxu0 0.0
  %306 = vmatpush1.msra.mxu0 0.0
  %307 = vmatprep.subr.mxu0 0.0
  %308 = vmatpush1.msra.mxu0 0.0
  %309 = vmatprep.subr.mxu0 0.0
  %310 = vmatpush1.msra.mxu0 0.0
  %311 = vmatprep.subr.mxu0 0.0
  %312 = vmatpush1.msra.mxu0 0.0
  %313 = vmatprep.subr.mxu0 0.0
  %314 = vmatpush1.msra.mxu0 0.0
  %315 = vmatprep.subr.mxu0 0.0
  %316 = vmatpush1.msra.mxu0 0.0
  %317 = vmatprep.subr.mxu0 0.0
  %318 = vmatpush1.msra.mxu0 0.0
  %319 = vmatprep.subr.mxu0 0.0
  %320 = vmatpush1.msra.mxu0 0.0
  %321 = vmatprep.subr.mxu0 0.0
  %322 = vmatpush1.msra.mxu0 0.0
  %323 = vmatprep.subr.mxu0 0.0
  %324 = vmatpush1.msra.mxu0 0.0
  %325 = vmatprep.subr.mxu0 0.0
  %326 = vmatpush1.msra.mxu0 0.0
  %327 = vmatprep.subr.mxu0 0.0
  %328 = vmatpush1.msra.mxu0 0.0
  %329 = vmatprep.subr.mxu0 0.0
  %330 = vmatpush1.msra.mxu0 0.0
  %331 = vmatprep.subr.mxu0 0.0
  %332 = vmatpush1.msra.mxu0 0.0
  %333 = vmatprep.mubr.f32.mxu0 0.0
  %334 = vmatmul.mubr.f32.gmra.mrb[0].mxu0 %v104
  %v335 = vpop.f32.mrb[0].mxu0
  %v336 = vadd.f32 %v45, %v335
  %v337 = vpop.f32.mrb[0].mxu0
  %338 = vmatprep.mubr.f32.mxu0 0.0
  %339 = vmatmul.mubr.f32.gmra.mrb[0].mxu0 %v107
  %v340 = vpop.f32.mrb[0].mxu0
  %v341 = vadd.f32 %v50, %v340
  %v342 = vpop.f32.mrb[0].mxu0
  %343 = vmatprep.mubr.f32.mxu0 0.0
  %344 = vmatmul.mubr.f32.gmra.mrb[0].mxu0 %v110
  %v345 = vpop.f32.mrb[0].mxu0
  %v346 = vadd.f32 %v55, %v345
  %v347 = vpop.f32.mrb[0].mxu0
  %348 = vmatprep.mubr.f32.mxu0 0.0
  %349 = vmatmul.mubr.f32.gmra.mrb[0].mxu0 %v113
  %v350 = vpop.f32.mrb[0].mxu0
  %v351 = vadd.f32 %v60, %v350
  %v352 = vpop.f32.mrb[0].mxu0
  %353 = vmatprep.mubr.f32.mxu0 0.0
  %354 = vmatmul.mubr.f32.gmra.mrb[0].mxu0 %v116
  %v355 = vpop.f32.mrb[0].mxu0
  %v356 = vadd.f32 %v65, %v355
  %v357 = vpop.f32.mrb[0].mxu0
  %358 = vmatprep.mubr.f32.mxu0 0.0
  %359 = vmatmul.mubr.f32.gmra.mrb[0].mxu0 %v119
  %v360 = vpop.f32.mrb[0].mxu0
  %v361 = vadd.f32 %v70, %v360
  %v362 = vpop.f32.mrb[0].mxu0
  %363 = vmatprep.mubr.f32.mxu0 0.0
  %364 = vmatmul.mubr.f32.gmra.mrb[0].mxu0 %v122
  %v365 = vpop.f32.mrb[0].mxu0
  %v366 = vadd.f32 %v75, %v365
  %v367 = vpop.f32.mrb[0].mxu0
  %368 = vmatprep.mubr.f32.mxu0 0.0
  %369 = vmatmul.mubr.f32.gmra.mrb[0].mxu0 %v125
  %v370 = vpop.f32.mrb[0].mxu0
  %v371 = vadd.f32 %v80, %v370
  %v372 = vpop.f32.mrb[0].mxu0
  %373 = vmatprep.mubr.f32.mxu0 0.0
  %374 = vmatmul.mubr.f32.gmra.mrb[0].mxu0 %v128
  %v375 = vpop.f32.mrb[0].mxu0
  %v376 = vadd.f32 %v85, %v375
  %v377 = vpop.f32.mrb[0].mxu0
  %378 = vmatprep.mubr.f32.mxu0 0.0
  %379 = vmatmul.mubr.f32.gmra.mrb[0].mxu0 %v131
  %v380 = vpop.f32.mrb[0].mxu0
  %v381 = vadd.f32 %v90, %v380
  %v382 = vpop.f32.mrb[0].mxu0
  %383 = vmatprep.mubr.f32.mxu0 0.0
  %384 = vmatmul.mubr.f32.gmra.mrb[0].mxu0 %v134
  %v385 = vpop.f32.mrb[0].mxu0
  %v386 = vadd.f32 %v95, %v385
  %v387 = vpop.f32.mrb[0].mxu0
  %388 = vmatprep.mubr.f32.mxu0 0.0
  %389 = vmatmul.mubr.f32.gmra.mrb[0].mxu0 %v137
  %v390 = vpop.f32.mrb[0].mxu0
  %v391 = vadd.f32 %v100, %v390
  %v392 = vpop.f32.mrb[0].mxu0
  %393 = vdwg.mxu0
  %394 = vxpose.xlu0.b32.start [1/16] %v206, 128
  %395 = vxpose.xlu0.b32.cont [2/16] 0.0, 128
  %396 = vxpose.xlu0.b32.cont [3/16] 0.0, 128
  %397 = vxpose.xlu0.b32.cont [4/16] 0.0, 128
  %398 = vxpose.xlu0.b32.cont [5/16] 0.0, 128
  %399 = vxpose.xlu0.b32.cont [6/16] 0.0, 128
  %400 = vxpose.xlu0.b32.cont [7/16] 0.0, 128
  %401 = vxpose.xlu0.b32.cont [8/16] 0.0, 128
  %402 = vxpose.xlu0.b32.cont [9/16] 0.0, 128
  %403 = vxpose.xlu0.b32.cont [10/16] 0.0, 128
  %404 = vxpose.xlu0.b32.cont [11/16] 0.0, 128
  %405 = vxpose.xlu0.b32.cont [12/16] 0.0, 128
  %406 = vxpose.xlu0.b32.cont [13/16] 0.0, 128
  %407 = vxpose.xlu0.b32.cont [14/16] 0.0, 128
  %408 = vxpose.xlu0.b32.cont [15/16] 0.0, 128
  %409 = vxpose.xlu0.b32.end [16/16] 0.0, 128
  %v410 = vpop.trf.xlu0
  %v411 = vpop.trf.xlu0
  %v412 = vpop.trf.xlu0
  %v413 = vpop.trf.xlu0
  %v414 = vpop.trf.xlu0
  %v415 = vpop.trf.xlu0
  %v416 = vpop.trf.xlu0
  %v417 = vpop.trf.xlu0
  %v418 = vpop.trf.xlu0
  %v419 = vpop.trf.xlu0
  %v420 = vpop.trf.xlu0
  %v421 = vpop.trf.xlu0
  %v422 = vpop.trf.xlu0
  %v423 = vpop.trf.xlu0
  %v424 = vpop.trf.xlu0
  %v425 = vpop.trf.xlu0
  %426 = vxpose.xlu0.b32.start [1/16] %v211, 128
  %427 = vxpose.xlu0.b32.cont [2/16] 0.0, 128
  %428 = vxpose.xlu0.b32.cont [3/16] 0.0, 128
  %429 = vxpose.xlu0.b32.cont [4/16] 0.0, 128
  %430 = vxpose.xlu0.b32.cont [5/16] 0.0, 128
  %431 = vxpose.xlu0.b32.cont [6/16] 0.0, 128
  %432 = vxpose.xlu0.b32.cont [7/16] 0.0, 128
  %433 = vxpose.xlu0.b32.cont [8/16] 0.0, 128
  %434 = vxpose.xlu0.b32.cont [9/16] 0.0, 128
  %435 = vxpose.xlu0.b32.cont [10/16] 0.0, 128
  %436 = vxpose.xlu0.b32.cont [11/16] 0.0, 128
  %437 = vxpose.xlu0.b32.cont [12/16] 0.0, 128
  %438 = vxpose.xlu0.b32.cont [13/16] 0.0, 128
  %439 = vxpose.xlu0.b32.cont [14/16] 0.0, 128
  %440 = vxpose.xlu0.b32.cont [15/16] 0.0, 128
  %441 = vxpose.xlu0.b32.end [16/16] 0.0, 128
  %v442 = vpop.trf.xlu0
  %v443 = vpop.trf.xlu0
  %v444 = vpop.trf.xlu0
  %v445 = vpop.trf.xlu0
  %v446 = vpop.trf.xlu0
  %v447 = vpop.trf.xlu0
  %v448 = vpop.trf.xlu0
  %v449 = vpop.trf.xlu0
  %v450 = vpop.trf.xlu0
  %v451 = vpop.trf.xlu0
  %v452 = vpop.trf.xlu0
  %v453 = vpop.trf.xlu0
  %v454 = vpop.trf.xlu0
  %v455 = vpop.trf.xlu0
  %v456 = vpop.trf.xlu0
  %v457 = vpop.trf.xlu0
  %458 = vxpose.xlu0.b32.start [1/16] %v216, 128
  %459 = vxpose.xlu0.b32.cont [2/16] 0.0, 128
  %460 = vxpose.xlu0.b32.cont [3/16] 0.0, 128
  %461 = vxpose.xlu0.b32.cont [4/16] 0.0, 128
  %462 = vxpose.xlu0.b32.cont [5/16] 0.0, 128
  %463 = vxpose.xlu0.b32.cont [6/16] 0.0, 128
  %464 = vxpose.xlu0.b32.cont [7/16] 0.0, 128
  %465 = vxpose.xlu0.b32.cont [8/16] 0.0, 128
  %466 = vxpose.xlu0.b32.cont [9/16] 0.0, 128
  %467 = vxpose.xlu0.b32.cont [10/16] 0.0, 128
  %468 = vxpose.xlu0.b32.cont [11/16] 0.0, 128
  %469 = vxpose.xlu0.b32.cont [12/16] 0.0, 128
  %470 = vxpose.xlu0.b32.cont [13/16] 0.0, 128
  %471 = vxpose.xlu0.b32.cont [14/16] 0.0, 128
  %472 = vxpose.xlu0.b32.cont [15/16] 0.0, 128
  %473 = vxpose.xlu0.b32.end [16/16] 0.0, 128
  %v474 = vpop.trf.xlu0
  %v475 = vpop.trf.xlu0
  %v476 = vpop.trf.xlu0
  %v477 = vpop.trf.xlu0
  %v478 = vpop.trf.xlu0
  %v479 = vpop.trf.xlu0
  %v480 = vpop.trf.xlu0
  %v481 = vpop.trf.xlu0
  %v482 = vpop.trf.xlu0
  %v483 = vpop.trf.xlu0
  %v484 = vpop.trf.xlu0
  %v485 = vpop.trf.xlu0
  %v486 = vpop.trf.xlu0
  %v487 = vpop.trf.xlu0
  %v488 = vpop.trf.xlu0
  %v489 = vpop.trf.xlu0
  %490 = vxpose.xlu0.b32.start [1/16] %v221, 128
  %491 = vxpose.xlu0.b32.cont [2/16] 0.0, 128
  %492 = vxpose.xlu0.b32.cont [3/16] 0.0, 128
  %493 = vxpose.xlu0.b32.cont [4/16] 0.0, 128
  %494 = vxpose.xlu0.b32.cont [5/16] 0.0, 128
  %495 = vxpose.xlu0.b32.cont [6/16] 0.0, 128
  %496 = vxpose.xlu0.b32.cont [7/16] 0.0, 128
  %497 = vxpose.xlu0.b32.cont [8/16] 0.0, 128
  %498 = vxpose.xlu0.b32.cont [9/16] 0.0, 128
  %499 = vxpose.xlu0.b32.cont [10/16] 0.0, 128
  %500 = vxpose.xlu0.b32.cont [11/16] 0.0, 128
  %501 = vxpose.xlu0.b32.cont [12/16] 0.0, 128
  %502 = vxpose.xlu0.b32.cont [13/16] 0.0, 128
  %503 = vxpose.xlu0.b32.cont [14/16] 0.0, 128
  %504 = vxpose.xlu0.b32.cont [15/16] 0.0, 128
  %505 = vxpose.xlu0.b32.end [16/16] 0.0, 128
  %v506 = vpop.trf.xlu0
  %v507 = vpop.trf.xlu0
  %v508 = vpop.trf.xlu0
  %v509 = vpop.trf.xlu0
  %v510 = vpop.trf.xlu0
  %v511 = vpop.trf.xlu0
  %v512 = vpop.trf.xlu0
  %v513 = vpop.trf.xlu0
  %v514 = vpop.trf.xlu0
  %v515 = vpop.trf.xlu0
  %v516 = vpop.trf.xlu0
  %v517 = vpop.trf.xlu0
  %v518 = vpop.trf.xlu0
  %v519 = vpop.trf.xlu0
  %v520 = vpop.trf.xlu0
  %v521 = vpop.trf.xlu0
  %522 = vxpose.xlu0.b32.start [1/16] %v336, 128
  %523 = vxpose.xlu0.b32.cont [2/16] 0.0, 128
  %524 = vxpose.xlu0.b32.cont [3/16] 0.0, 128
  %525 = vxpose.xlu0.b32.cont [4/16] 0.0, 128
  %526 = vxpose.xlu0.b32.cont [5/16] 0.0, 128
  %527 = vxpose.xlu0.b32.cont [6/16] 0.0, 128
  %528 = vxpose.xlu0.b32.cont [7/16] 0.0, 128
  %529 = vxpose.xlu0.b32.cont [8/16] 0.0, 128
  %530 = vxpose.xlu0.b32.cont [9/16] 0.0, 128
  %531 = vxpose.xlu0.b32.cont [10/16] 0.0, 128
  %532 = vxpose.xlu0.b32.cont [11/16] 0.0, 128
  %533 = vxpose.xlu0.b32.cont [12/16] 0.0, 128
  %534 = vxpose.xlu0.b32.cont [13/16] 0.0, 128
  %535 = vxpose.xlu0.b32.cont [14/16] 0.0, 128
  %536 = vxpose.xlu0.b32.cont [15/16] 0.0, 128
  %537 = vxpose.xlu0.b32.end [16/16] 0.0, 128
  %v538 = vpop.trf.xlu0
  %v539 = vpop.trf.xlu0
  %v540 = vpop.trf.xlu0
  %v541 = vpop.trf.xlu0
  %v542 = vpop.trf.xlu0
  %v543 = vpop.trf.xlu0
  %v544 = vpop.trf.xlu0
  %v545 = vpop.trf.xlu0
  %v546 = vpop.trf.xlu0
  %v547 = vpop.trf.xlu0
  %v548 = vpop.trf.xlu0
  %v549 = vpop.trf.xlu0
  %v550 = vpop.trf.xlu0
  %v551 = vpop.trf.xlu0
  %v552 = vpop.trf.xlu0
  %v553 = vpop.trf.xlu0
  %554 = vxpose.xlu0.b32.start [1/16] %v341, 128
  %555 = vxpose.xlu0.b32.cont [2/16] 0.0, 128
  %556 = vxpose.xlu0.b32.cont [3/16] 0.0, 128
  %557 = vxpose.xlu0.b32.cont [4/16] 0.0, 128
  %558 = vxpose.xlu0.b32.cont [5/16] 0.0, 128
  %559 = vxpose.xlu0.b32.cont [6/16] 0.0, 128
  %560 = vxpose.xlu0.b32.cont [7/16] 0.0, 128
  %561 = vxpose.xlu0.b32.cont [8/16] 0.0, 128
  %562 = vxpose.xlu0.b32.cont [9/16] 0.0, 128
  %563 = vxpose.xlu0.b32.cont [10/16] 0.0, 128
  %564 = vxpose.xlu0.b32.cont [11/16] 0.0, 128
  %565 = vxpose.xlu0.b32.cont [12/16] 0.0, 128
  %566 = vxpose.xlu0.b32.cont [13/16] 0.0, 128
  %567 = vxpose.xlu0.b32.cont [14/16] 0.0, 128
  %568 = vxpose.xlu0.b32.cont [15/16] 0.0, 128
  %569 = vxpose.xlu0.b32.end [16/16] 0.0, 128
  %v570 = vpop.trf.xlu0
  %v571 = vpop.trf.xlu0
  %v572 = vpop.trf.xlu0
  %v573 = vpop.trf.xlu0
  %v574 = vpop.trf.xlu0
  %v575 = vpop.trf.xlu0
  %v576 = vpop.trf.xlu0
  %v577 = vpop.trf.xlu0
  %v578 = vpop.trf.xlu0
  %v579 = vpop.trf.xlu0
  %v580 = vpop.trf.xlu0
  %v581 = vpop.trf.xlu0
  %v582 = vpop.trf.xlu0
  %v583 = vpop.trf.xlu0
  %v584 = vpop.trf.xlu0
  %v585 = vpop.trf.xlu0
  %586 = vxpose.xlu0.b32.start [1/16] %v346, 128
  %587 = vxpose.xlu0.b32.cont [2/16] 0.0, 128
  %588 = vxpose.xlu0.b32.cont [3/16] 0.0, 128
  %589 = vxpose.xlu0.b32.cont [4/16] 0.0, 128
  %590 = vxpose.xlu0.b32.cont [5/16] 0.0, 128
  %591 = vxpose.xlu0.b32.cont [6/16] 0.0, 128
  %592 = vxpose.xlu0.b32.cont [7/16] 0.0, 128
  %593 = vxpose.xlu0.b32.cont [8/16] 0.0, 128
  %594 = vxpose.xlu0.b32.cont [9/16] 0.0, 128
  %595 = vxpose.xlu0.b32.cont [10/16] 0.0, 128
  %596 = vxpose.xlu0.b32.cont [11/16] 0.0, 128
  %597 = vxpose.xlu0.b32.cont [12/16] 0.0, 128
  %598 = vxpose.xlu0.b32.cont [13/16] 0.0, 128
  %599 = vxpose.xlu0.b32.cont [14/16] 0.0, 128
  %600 = vxpose.xlu0.b32.cont [15/16] 0.0, 128
  %601 = vxpose.xlu0.b32.end [16/16] 0.0, 128
  %v602 = vpop.trf.xlu0
  %v603 = vpop.trf.xlu0
  %v604 = vpop.trf.xlu0
  %v605 = vpop.trf.xlu0
  %v606 = vpop.trf.xlu0
  %v607 = vpop.trf.xlu0
  %v608 = vpop.trf.xlu0
  %v609 = vpop.trf.xlu0
  %v610 = vpop.trf.xlu0
  %v611 = vpop.trf.xlu0
  %v612 = vpop.trf.xlu0
  %v613 = vpop.trf.xlu0
  %v614 = vpop.trf.xlu0
  %v615 = vpop.trf.xlu0
  %v616 = vpop.trf.xlu0
  %v617 = vpop.trf.xlu0
  %618 = vxpose.xlu0.b32.start [1/16] %v351, 128
  %619 = vxpose.xlu0.b32.cont [2/16] 0.0, 128
  %620 = vxpose.xlu0.b32.cont [3/16] 0.0, 128
  %621 = vxpose.xlu0.b32.cont [4/16] 0.0, 128
  %622 = vxpose.xlu0.b32.cont [5/16] 0.0, 128
  %623 = vxpose.xlu0.b32.cont [6/16] 0.0, 128
  %624 = vxpose.xlu0.b32.cont [7/16] 0.0, 128
  %625 = vxpose.xlu0.b32.cont [8/16] 0.0, 128
  %626 = vxpose.xlu0.b32.cont [9/16] 0.0, 128
  %627 = vxpose.xlu0.b32.cont [10/16] 0.0, 128
  %628 = vxpose.xlu0.b32.cont [11/16] 0.0, 128
  %629 = vxpose.xlu0.b32.cont [12/16] 0.0, 128
  %630 = vxpose.xlu0.b32.cont [13/16] 0.0, 128
  %631 = vxpose.xlu0.b32.cont [14/16] 0.0, 128
  %632 = vxpose.xlu0.b32.cont [15/16] 0.0, 128
  %633 = vxpose.xlu0.b32.end [16/16] 0.0, 128
  %v634 = vpop.trf.xlu0
  %v635 = vpop.trf.xlu0
  %v636 = vpop.trf.xlu0
  %v637 = vpop.trf.xlu0
  %v638 = vpop.trf.xlu0
  %v639 = vpop.trf.xlu0
  %v640 = vpop.trf.xlu0
  %v641 = vpop.trf.xlu0
  %v642 = vpop.trf.xlu0
  %v643 = vpop.trf.xlu0
  %v644 = vpop.trf.xlu0
  %v645 = vpop.trf.xlu0
  %v646 = vpop.trf.xlu0
  %v647 = vpop.trf.xlu0
  %v648 = vpop.trf.xlu0
  %v649 = vpop.trf.xlu0
  %vm650 = vcmask 64512
  %v652 = vsel %vm650, %v410, 0
  %v655 = vsel %vm650, %v411, 0
  %v658 = vsel %vm650, %v412, 0
  %v661 = vsel %vm650, %v413, 0
  %v664 = vsel %vm650, %v414, 0
  %v667 = vsel %vm650, %v415, 0
  %v670 = vsel %vm650, %v416, 0
  %v673 = vsel %vm650, %v417, 0
  %675 = vmatprep.subr.mxu0 0.0
  %676 = vmatpush1.msra.mxu0 %v226
  %677 = vmatprep.subr.mxu0 0.0
  %678 = vmatpush1.msra.mxu0 0.0
  %679 = vmatprep.subr.mxu0 0.0
  %680 = vmatpush1.msra.mxu0 0.0
  %681 = vmatprep.subr.mxu0 0.0
  %682 = vmatpush1.msra.mxu0 0.0
  %683 = vmatprep.subr.mxu0 0.0
  %684 = vmatpush1.msra.mxu0 0.0
  %685 = vmatprep.subr.mxu0 0.0
  %686 = vmatpush1.msra.mxu0 0.0
  %687 = vmatprep.subr.mxu0 0.0
  %688 = vmatpush1.msra.mxu0 0.0
  %689 = vmatprep.subr.mxu0 0.0
  %690 = vmatpush1.msra.mxu0 0.0
  %691 = vmatprep.subr.mxu0 0.0
  %692 = vmatpush1.msra.mxu0 0.0
  %693 = vmatprep.subr.mxu0 0.0
  %694 = vmatpush1.msra.mxu0 0.0
  %695 = vmatprep.subr.mxu0 0.0
  %696 = vmatpush1.msra.mxu0 0.0
  %697 = vmatprep.subr.mxu0 0.0
  %698 = vmatpush1.msra.mxu0 0.0
  %699 = vmatprep.subr.mxu0 0.0
  %700 = vmatpush1.msra.mxu0 0.0
  %701 = vmatprep.subr.mxu0 0.0
  %702 = vmatpush1.msra.mxu0 0.0
  %703 = vmatprep.subr.mxu0 0.0
  %704 = vmatpush1.msra.mxu0 0.0
  %705 = vmatprep.subr.mxu0 0.0
  %706 = vmatpush1.msra.mxu0 0.0
  %707 = vmatprep.subr.mxu0 0.0
  %708 = vmatpush1.msra.mxu0 0.0
  %709 = vmatprep.subr.mxu0 0.0
  %710 = vmatpush1.msra.mxu0 0.0
  %711 = vmatprep.subr.mxu0 0.0
  %712 = vmatpush1.msra.mxu0 0.0
  %713 = vmatprep.subr.mxu0 0.0
  %714 = vmatpush1.msra.mxu0 0.0
  %715 = vmatprep.subr.mxu0 0.0
  %716 = vmatpush1.msra.mxu0 0.0
  %717 = vmatprep.subr.mxu0 0.0
  %718 = vmatpush1.msra.mxu0 0.0
  %719 = vmatprep.subr.mxu0 0.0
  %720 = vmatpush1.msra.mxu0 0.0
  %721 = vmatprep.subr.mxu0 0.0
  %722 = vmatpush1.msra.mxu0 0.0
  %723 = vmatprep.subr.mxu0 0.0
  %724 = vmatpush1.msra.mxu0 0.0
  %725 = vmatprep.subr.mxu0 0.0
  %726 = vmatpush1.msra.mxu0 0.0
  %727 = vmatprep.subr.mxu0 0.0
  %728 = vmatpush1.msra.mxu0 0.0
  %729 = vmatprep.subr.mxu0 0.0
  %730 = vmatpush1.msra.mxu0 0.0
  %731 = vmatprep.subr.mxu0 0.0
  %732 = vmatpush1.msra.mxu0 0.0
  %733 = vmatprep.subr.mxu0 0.0
  %734 = vmatpush1.msra.mxu0 0.0
  %735 = vmatprep.subr.mxu0 0.0
  %736 = vmatpush1.msra.mxu0 0.0
  %737 = vmatprep.subr.mxu0 0.0
  %738 = vmatpush1.msra.mxu0 0.0
  %739 = vmatprep.mubr.f32.mxu0 0.0
  %740 = vmatmul.mubr.f32.gmra.mrb[0].mxu0 %v652
  %v741 = vpop.f32.mrb[0].mxu0
  %v742 = vadd.f32 0.0, %v741
  %v743 = vpop.f32.mrb[0].mxu0
  %744 = vmatprep.mubr.f32.mxu0 0.0
  %745 = vmatmul.mubr.f32.gmra.mrb[0].mxu0 %v655
  %v746 = vpop.f32.mrb[0].mxu0
  %v747 = vadd.f32 0.0, %v746
  %v748 = vpop.f32.mrb[0].mxu0
  %749 = vmatprep.mubr.f32.mxu0 0.0
  %750 = vmatmul.mubr.f32.gmra.mrb[0].mxu0 %v658
  %v751 = vpop.f32.mrb[0].mxu0
  %v752 = vadd.f32 0.0, %v751
  %v753 = vpop.f32.mrb[0].mxu0
  %754 = vmatprep.mubr.f32.mxu0 0.0
  %755 = vmatmul.mubr.f32.gmra.mrb[0].mxu0 %v661
  %v756 = vpop.f32.mrb[0].mxu0
  %v757 = vadd.f32 0.0, %v756
  %v758 = vpop.f32.mrb[0].mxu0
  %759 = vmatprep.mubr.f32.mxu0 0.0
  %760 = vmatmul.mubr.f32.gmra.mrb[0].mxu0 %v664
  %v761 = vpop.f32.mrb[0].mxu0
  %v762 = vadd.f32 0.0, %v761
  %v763 = vpop.f32.mrb[0].mxu0
  %764 = vmatprep.mubr.f32.mxu0 0.0
  %765 = vmatmul.mubr.f32.gmra.mrb[0].mxu0 %v667
  %v766 = vpop.f32.mrb[0].mxu0
  %v767 = vadd.f32 0.0, %v766
  %v768 = vpop.f32.mrb[0].mxu0
  %769 = vmatprep.mubr.f32.mxu0 0.0
  %770 = vmatmul.mubr.f32.gmra.mrb[0].mxu0 %v670
  %v771 = vpop.f32.mrb[0].mxu0
  %v772 = vadd.f32 0.0, %v771
  %v773 = vpop.f32.mrb[0].mxu0
  %774 = vmatprep.mubr.f32.mxu0 0.0
  %775 = vmatmul.mubr.f32.gmra.mrb[0].mxu0 %v673
  %v776 = vpop.f32.mrb[0].mxu0
  %v777 = vadd.f32 0.0, %v776
  %v778 = vpop.f32.mrb[0].mxu0
  %779 = vdwg.mxu0
  %v781 = vsel %vm650, %v442, 0
  %v784 = vsel %vm650, %v443, 0
  %v787 = vsel %vm650, %v444, 0
  %v790 = vsel %vm650, %v445, 0
  %v793 = vsel %vm650, %v446, 0
  %v796 = vsel %vm650, %v447, 0
  %v799 = vsel %vm650, %v448, 0
  %v802 = vsel %vm650, %v449, 0
  %804 = vmatprep.subr.mxu0 0.0
  %805 = vmatpush1.msra.mxu0 %v231
  %806 = vmatprep.subr.mxu0 0.0
  %807 = vmatpush1.msra.mxu0 0.0
  %808 = vmatprep.subr.mxu0 0.0
  %809 = vmatpush1.msra.mxu0 0.0
  %810 = vmatprep.subr.mxu0 0.0
  %811 = vmatpush1.msra.mxu0 0.0
  %812 = vmatprep.subr.mxu0 0.0
  %813 = vmatpush1.msra.mxu0 0.0
  %814 = vmatprep.subr.mxu0 0.0
  %815 = vmatpush1.msra.mxu0 0.0
  %816 = vmatprep.subr.mxu0 0.0
  %817 = vmatpush1.msra.mxu0 0.0
  %818 = vmatprep.subr.mxu0 0.0
  %819 = vmatpush1.msra.mxu0 0.0
  %820 = vmatprep.subr.mxu0 0.0
  %821 = vmatpush1.msra.mxu0 0.0
  %822 = vmatprep.subr.mxu0 0.0
  %823 = vmatpush1.msra.mxu0 0.0
  %824 = vmatprep.subr.mxu0 0.0
  %825 = vmatpush1.msra.mxu0 0.0
  %826 = vmatprep.subr.mxu0 0.0
  %827 = vmatpush1.msra.mxu0 0.0
  %828 = vmatprep.subr.mxu0 0.0
  %829 = vmatpush1.msra.mxu0 0.0
  %830 = vmatprep.subr.mxu0 0.0
  %831 = vmatpush1.msra.mxu0 0.0
  %832 = vmatprep.subr.mxu0 0.0
  %833 = vmatpush1.msra.mxu0 0.0
  %834 = vmatprep.subr.mxu0 0.0
  %835 = vmatpush1.msra.mxu0 0.0
  %836 = vmatprep.subr.mxu0 0.0
  %837 = vmatpush1.msra.mxu0 0.0
  %838 = vmatprep.subr.mxu0 0.0
  %839 = vmatpush1.msra.mxu0 0.0
  %840 = vmatprep.subr.mxu0 0.0
  %841 = vmatpush1.msra.mxu0 0.0
  %842 = vmatprep.subr.mxu0 0.0
  %843 = vmatpush1.msra.mxu0 0.0
  %844 = vmatprep.subr.mxu0 0.0
  %845 = vmatpush1.msra.mxu0 0.0
  %846 = vmatprep.subr.mxu0 0.0
  %847 = vmatpush1.msra.mxu0 0.0
  %848 = vmatprep.subr.mxu0 0.0
  %849 = vmatpush1.msra.mxu0 0.0
  %850 = vmatprep.subr.mxu0 0.0
  %851 = vmatpush1.msra.mxu0 0.0
  %852 = vmatprep.subr.mxu0 0.0
  %853 = vmatpush1.msra.mxu0 0.0
  %854 = vmatprep.subr.mxu0 0.0
  %855 = vmatpush1.msra.mxu0 0.0
  %856 = vmatprep.subr.mxu0 0.0
  %857 = vmatpush1.msra.mxu0 0.0
  %858 = vmatprep.subr.mxu0 0.0
  %859 = vmatpush1.msra.mxu0 0.0
  %860 = vmatprep.subr.mxu0 0.0
  %861 = vmatpush1.msra.mxu0 0.0
  %862 = vmatprep.subr.mxu0 0.0
  %863 = vmatpush1.msra.mxu0 0.0
  %864 = vmatprep.subr.mxu0 0.0
  %865 = vmatpush1.msra.mxu0 0.0
  %866 = vmatprep.subr.mxu0 0.0
  %867 = vmatpush1.msra.mxu0 0.0
  %868 = vmatprep.mubr.f32.mxu0 0.0
  %869 = vmatmul.mubr.f32.gmra.mrb[0].mxu0 %v781
  %v870 = vpop.f32.mrb[0].mxu0
  %v871 = vadd.f32 0.0, %v870
  %v872 = vpop.f32.mrb[0].mxu0
  %873 = vmatprep.mubr.f32.mxu0 0.0
  %874 = vmatmul.mubr.f32.gmra.mrb[0].mxu0 %v784
  %v875 = vpop.f32.mrb[0].mxu0
  %v876 = vadd.f32 0.0, %v875
  %v877 = vpop.f32.mrb[0].mxu0
  %878 = vmatprep.mubr.f32.mxu0 0.0
  %879 = vmatmul.mubr.f32.gmra.mrb[0].mxu0 %v787
  %v880 = vpop.f32.mrb[0].mxu0
  %v881 = vadd.f32 0.0, %v880
  %v882 = vpop.f32.mrb[0].mxu0
  %883 = vmatprep.mubr.f32.mxu0 0.0
  %884 = vmatmul.mubr.f32.gmra.mrb[0].mxu0 %v790
  %v885 = vpop.f32.mrb[0].mxu0
  %v886 = vadd.f32 0.0, %v885
  %v887 = vpop.f32.mrb[0].mxu0
  %888 = vmatprep.mubr.f32.mxu0 0.0
  %889 = vmatmul.mubr.f32.gmra.mrb[0].mxu0 %v793
  %v890 = vpop.f32.mrb[0].mxu0
  %v891 = vadd.f32 0.0, %v890
  %v892 = vpop.f32.mrb[0].mxu0
  %893 = vmatprep.mubr.f32.mxu0 0.0
  %894 = vmatmul.mubr.f32.gmra.mrb[0].mxu0 %v796
  %v895 = vpop.f32.mrb[0].mxu0
  %v896 = vadd.f32 0.0, %v895
  %v897 = vpop.f32.mrb[0].mxu0
  %898 = vmatprep.mubr.f32.mxu0 0.0
  %899 = vmatmul.mubr.f32.gmra.mrb[0].mxu0 %v799
  %v900 = vpop.f32.mrb[0].mxu0
  %v901 = vadd.f32 0.0, %v900
  %v902 = vpop.f32.mrb[0].mxu0
  %903 = vmatprep.mubr.f32.mxu0 0.0
  %904 = vmatmul.mubr.f32.gmra.mrb[0].mxu0 %v802
  %v905 = vpop.f32.mrb[0].mxu0
  %v906 = vadd.f32 0.0, %v905
  %v907 = vpop.f32.mrb[0].mxu0
  %908 = vdwg.mxu0
  %v910 = vsel %vm650, %v474, 0
  %v913 = vsel %vm650, %v475, 0
  %v916 = vsel %vm650, %v476, 0
  %v919 = vsel %vm650, %v477, 0
  %v922 = vsel %vm650, %v478, 0
  %v925 = vsel %vm650, %v479, 0
  %v928 = vsel %vm650, %v480, 0
  %v931 = vsel %vm650, %v481, 0
  %933 = vmatprep.subr.mxu0 0.0
  %934 = vmatpush1.msra.mxu0 %v236
  %935 = vmatprep.subr.mxu0 0.0
  %936 = vmatpush1.msra.mxu0 0.0
  %937 = vmatprep.subr.mxu0 0.0
  %938 = vmatpush1.msra.mxu0 0.0
  %939 = vmatprep.subr.mxu0 0.0
  %940 = vmatpush1.msra.mxu0 0.0
  %941 = vmatprep.subr.mxu0 0.0
  %942 = vmatpush1.msra.mxu0 0.0
  %943 = vmatprep.subr.mxu0 0.0
  %944 = vmatpush1.msra.mxu0 0.0
  %945 = vmatprep.subr.mxu0 0.0
  %946 = vmatpush1.msra.mxu0 0.0
  %947 = vmatprep.subr.mxu0 0.0
  %948 = vmatpush1.msra.mxu0 0.0
  %949 = vmatprep.subr.mxu0 0.0
  %950 = vmatpush1.msra.mxu0 0.0
  %951 = vmatprep.subr.mxu0 0.0
  %952 = vmatpush1.msra.mxu0 0.0
  %953 = vmatprep.subr.mxu0 0.0
  %954 = vmatpush1.msra.mxu0 0.0
  %955 = vmatprep.subr.mxu0 0.0
  %956 = vmatpush1.msra.mxu0 0.0
  %957 = vmatprep.subr.mxu0 0.0
  %958 = vmatpush1.msra.mxu0 0.0
  %959 = vmatprep.subr.mxu0 0.0
  %960 = vmatpush1.msra.mxu0 0.0
  %961 = vmatprep.subr.mxu0 0.0
  %962 = vmatpush1.msra.mxu0 0.0
  %963 = vmatprep.subr.mxu0 0.0
  %964 = vmatpush1.msra.mxu0 0.0
  %965 = vmatprep.subr.mxu0 0.0
  %966 = vmatpush1.msra.mxu0 0.0
  %967 = vmatprep.subr.mxu0 0.0
  %968 = vmatpush1.msra.mxu0 0.0
  %969 = vmatprep.subr.mxu0 0.0
  %970 = vmatpush1.msra.mxu0 0.0
  %971 = vmatprep.subr.mxu0 0.0
  %972 = vmatpush1.msra.mxu0 0.0
  %973 = vmatprep.subr.mxu0 0.0
  %974 = vmatpush1.msra.mxu0 0.0
  %975 = vmatprep.subr.mxu0 0.0
  %976 = vmatpush1.msra.mxu0 0.0
  %977 = vmatprep.subr.mxu0 0.0
  %978 = vmatpush1.msra.mxu0 0.0
  %979 = vmatprep.subr.mxu0 0.0
  %980 = vmatpush1.msra.mxu0 0.0
  %981 = vmatprep.subr.mxu0 0.0
  %982 = vmatpush1.msra.mxu0 0.0
  %983 = vmatprep.subr.mxu0 0.0
  %984 = vmatpush1.msra.mxu0 0.0
  %985 = vmatprep.subr.mxu0 0.0
  %986 = vmatpush1.msra.mxu0 0.0
  %987 = vmatprep.subr.mxu0 0.0
  %988 = vmatpush1.msra.mxu0 0.0
  %989 = vmatprep.subr.mxu0 0.0
  %990 = vmatpush1.msra.mxu0 0.0
  %991 = vmatprep.subr.mxu0 0.0
  %992 = vmatpush1.msra.mxu0 0.0
  %993 = vmatprep.subr.mxu0 0.0
  %994 = vmatpush1.msra.mxu0 0.0
  %995 = vmatprep.subr.mxu0 0.0
  %996 = vmatpush1.msra.mxu0 0.0
  %997 = vmatprep.mubr.f32.mxu0 0.0
  %998 = vmatmul.mubr.f32.gmra.mrb[0].mxu0 %v910
  %v999 = vpop.f32.mrb[0].mxu0
  %v1000 = vadd.f32 0.0, %v999
  %v1001 = vpop.f32.mrb[0].mxu0
  %1002 = vmatprep.mubr.f32.mxu0 0.0
  %1003 = vmatmul.mubr.f32.gmra.mrb[0].mxu0 %v913
  %v1004 = vpop.f32.mrb[0].mxu0
  %v1005 = vadd.f32 0.0, %v1004
  %v1006 = vpop.f32.mrb[0].mxu0
  %1007 = vmatprep.mubr.f32.mxu0 0.0
  %1008 = vmatmul.mubr.f32.gmra.mrb[0].mxu0 %v916
  %v1009 = vpop.f32.mrb[0].mxu0
  %v1010 = vadd.f32 0.0, %v1009
  %v1011 = vpop.f32.mrb[0].mxu0
  %1012 = vmatprep.mubr.f32.mxu0 0.0
  %1013 = vmatmul.mubr.f32.gmra.mrb[0].mxu0 %v919
  %v1014 = vpop.f32.mrb[0].mxu0
  %v1015 = vadd.f32 0.0, %v1014
  %v1016 = vpop.f32.mrb[0].mxu0
  %1017 = vmatprep.mubr.f32.mxu0 0.0
  %1018 = vmatmul.mubr.f32.gmra.mrb[0].mxu0 %v922
  %v1019 = vpop.f32.mrb[0].mxu0
  %v1020 = vadd.f32 0.0, %v1019
  %v1021 = vpop.f32.mrb[0].mxu0
  %1022 = vmatprep.mubr.f32.mxu0 0.0
  %1023 = vmatmul.mubr.f32.gmra.mrb[0].mxu0 %v925
  %v1024 = vpop.f32.mrb[0].mxu0
  %v1025 = vadd.f32 0.0, %v1024
  %v1026 = vpop.f32.mrb[0].mxu0
  %1027 = vmatprep.mubr.f32.mxu0 0.0
  %1028 = vmatmul.mubr.f32.gmra.mrb[0].mxu0 %v928
  %v1029 = vpop.f32.mrb[0].mxu0
  %v1030 = vadd.f32 0.0, %v1029
  %v1031 = vpop.f32.mrb[0].mxu0
  %1032 = vmatprep.mubr.f32.mxu0 0.0
  %1033 = vmatmul.mubr.f32.gmra.mrb[0].mxu0 %v931
  %v1034 = vpop.f32.mrb[0].mxu0
  %v1035 = vadd.f32 0.0, %v1034
  %v1036 = vpop.f32.mrb[0].mxu0
  %1037 = vdwg.mxu0
  %v1039 = vsel %vm650, %v506, 0
  %v1042 = vsel %vm650, %v507, 0
  %v1045 = vsel %vm650, %v508, 0
  %v1048 = vsel %vm650, %v509, 0
  %v1051 = vsel %vm650, %v510, 0
  %v1054 = vsel %vm650, %v511, 0
  %v1057 = vsel %vm650, %v512, 0
  %v1060 = vsel %vm650, %v513, 0
  %1062 = vmatprep.subr.mxu0 0.0
  %1063 = vmatpush1.msra.mxu0 %v241
  %1064 = vmatprep.subr.mxu0 0.0
  %1065 = vmatpush1.msra.mxu0 0.0
  %1066 = vmatprep.subr.mxu0 0.0
  %1067 = vmatpush1.msra.mxu0 0.0
  %1068 = vmatprep.subr.mxu0 0.0
  %1069 = vmatpush1.msra.mxu0 0.0
  %1070 = vmatprep.subr.mxu0 0.0
  %1071 = vmatpush1.msra.mxu0 0.0
  %1072 = vmatprep.subr.mxu0 0.0
  %1073 = vmatpush1.msra.mxu0 0.0
  %1074 = vmatprep.subr.mxu0 0.0
  %1075 = vmatpush1.msra.mxu0 0.0
  %1076 = vmatprep.subr.mxu0 0.0
  %1077 = vmatpush1.msra.mxu0 0.0
  %1078 = vmatprep.subr.mxu0 0.0
  %1079 = vmatpush1.msra.mxu0 0.0
  %1080 = vmatprep.subr.mxu0 0.0
  %1081 = vmatpush1.msra.mxu0 0.0
  %1082 = vmatprep.subr.mxu0 0.0
  %1083 = vmatpush1.msra.mxu0 0.0
  %1084 = vmatprep.subr.mxu0 0.0
  %1085 = vmatpush1.msra.mxu0 0.0
  %1086 = vmatprep.subr.mxu0 0.0
  %1087 = vmatpush1.msra.mxu0 0.0
  %1088 = vmatprep.subr.mxu0 0.0
  %1089 = vmatpush1.msra.mxu0 0.0
  %1090 = vmatprep.subr.mxu0 0.0
  %1091 = vmatpush1.msra.mxu0 0.0
  %1092 = vmatprep.subr.mxu0 0.0
  %1093 = vmatpush1.msra.mxu0 0.0
  %1094 = vmatprep.subr.mxu0 0.0
  %1095 = vmatpush1.msra.mxu0 0.0
  %1096 = vmatprep.subr.mxu0 0.0
  %1097 = vmatpush1.msra.mxu0 0.0
  %1098 = vmatprep.subr.mxu0 0.0
  %1099 = vmatpush1.msra.mxu0 0.0
  %1100 = vmatprep.subr.mxu0 0.0
  %1101 = vmatpush1.msra.mxu0 0.0
  %1102 = vmatprep.subr.mxu0 0.0
  %1103 = vmatpush1.msra.mxu0 0.0
  %1104 = vmatprep.subr.mxu0 0.0
  %1105 = vmatpush1.msra.mxu0 0.0
  %1106 = vmatprep.subr.mxu0 0.0
  %1107 = vmatpush1.msra.mxu0 0.0
  %1108 = vmatprep.subr.mxu0 0.0
  %1109 = vmatpush1.msra.mxu0 0.0
  %1110 = vmatprep.subr.mxu0 0.0
  %1111 = vmatpush1.msra.mxu0 0.0
  %1112 = vmatprep.subr.mxu0 0.0
  %1113 = vmatpush1.msra.mxu0 0.0
  %1114 = vmatprep.subr.mxu0 0.0
  %1115 = vmatpush1.msra.mxu0 0.0
  %1116 = vmatprep.subr.mxu0 0.0
  %1117 = vmatpush1.msra.mxu0 0.0
  %1118 = vmatprep.subr.mxu0 0.0
  %1119 = vmatpush1.msra.mxu0 0.0
  %1120 = vmatprep.subr.mxu0 0.0
  %1121 = vmatpush1.msra.mxu0 0.0
  %1122 = vmatprep.subr.mxu0 0.0
  %1123 = vmatpush1.msra.mxu0 0.0
  %1124 = vmatprep.subr.mxu0 0.0
  %1125 = vmatpush1.msra.mxu0 0.0
  %1126 = vmatprep.mubr.f32.mxu0 0.0
  %1127 = vmatmul.mubr.f32.gmra.mrb[0].mxu0 %v1039
  %v1128 = vpop.f32.mrb[0].mxu0
  %v1129 = vadd.f32 0.0, %v1128
  %v1130 = vpop.f32.mrb[0].mxu0
  %1131 = vmatprep.mubr.f32.mxu0 0.0
  %1132 = vmatmul.mubr.f32.gmra.mrb[0].mxu0 %v1042
  %v1133 = vpop.f32.mrb[0].mxu0
  %v1134 = vadd.f32 0.0, %v1133
  %v1135 = vpop.f32.mrb[0].mxu0
  %1136 = vmatprep.mubr.f32.mxu0 0.0
  %1137 = vmatmul.mubr.f32.gmra.mrb[0].mxu0 %v1045
  %v1138 = vpop.f32.mrb[0].mxu0
  %v1139 = vadd.f32 0.0, %v1138
  %v1140 = vpop.f32.mrb[0].mxu0
  %1141 = vmatprep.mubr.f32.mxu0 0.0
  %1142 = vmatmul.mubr.f32.gmra.mrb[0].mxu0 %v1048
  %v1143 = vpop.f32.mrb[0].mxu0
  %v1144 = vadd.f32 0.0, %v1143
  %v1145 = vpop.f32.mrb[0].mxu0
  %1146 = vmatprep.mubr.f32.mxu0 0.0
  %1147 = vmatmul.mubr.f32.gmra.mrb[0].mxu0 %v1051
  %v1148 = vpop.f32.mrb[0].mxu0
  %v1149 = vadd.f32 0.0, %v1148
  %v1150 = vpop.f32.mrb[0].mxu0
  %1151 = vmatprep.mubr.f32.mxu0 0.0
  %1152 = vmatmul.mubr.f32.gmra.mrb[0].mxu0 %v1054
  %v1153 = vpop.f32.mrb[0].mxu0
  %v1154 = vadd.f32 0.0, %v1153
  %v1155 = vpop.f32.mrb[0].mxu0
  %1156 = vmatprep.mubr.f32.mxu0 0.0
  %1157 = vmatmul.mubr.f32.gmra.mrb[0].mxu0 %v1057
  %v1158 = vpop.f32.mrb[0].mxu0
  %v1159 = vadd.f32 0.0, %v1158
  %v1160 = vpop.f32.mrb[0].mxu0
  %1161 = vmatprep.mubr.f32.mxu0 0.0
  %1162 = vmatmul.mubr.f32.gmra.mrb[0].mxu0 %v1060
  %v1163 = vpop.f32.mrb[0].mxu0
  %v1164 = vadd.f32 0.0, %v1163
  %v1165 = vpop.f32.mrb[0].mxu0
  %1166 = vdwg.mxu0
  %v1168 = vsel %vm650, %v538, 0
  %v1171 = vsel %vm650, %v539, 0
  %v1174 = vsel %vm650, %v540, 0
  %v1177 = vsel %vm650, %v541, 0
  %v1180 = vsel %vm650, %v542, 0
  %v1183 = vsel %vm650, %v543, 0
  %v1186 = vsel %vm650, %v544, 0
  %v1189 = vsel %vm650, %v545, 0
  %1191 = vmatprep.subr.mxu0 0.0
  %1192 = vmatpush1.msra.mxu0 %v356
  %1193 = vmatprep.subr.mxu0 0.0
  %1194 = vmatpush1.msra.mxu0 0.0
  %1195 = vmatprep.subr.mxu0 0.0
  %1196 = vmatpush1.msra.mxu0 0.0
  %1197 = vmatprep.subr.mxu0 0.0
  %1198 = vmatpush1.msra.mxu0 0.0
  %1199 = vmatprep.subr.mxu0 0.0
  %1200 = vmatpush1.msra.mxu0 0.0
  %1201 = vmatprep.subr.mxu0 0.0
  %1202 = vmatpush1.msra.mxu0 0.0
  %1203 = vmatprep.subr.mxu0 0.0
  %1204 = vmatpush1.msra.mxu0 0.0
  %1205 = vmatprep.subr.mxu0 0.0
  %1206 = vmatpush1.msra.mxu0 0.0
  %1207 = vmatprep.subr.mxu0 0.0
  %1208 = vmatpush1.msra.mxu0 0.0
  %1209 = vmatprep.subr.mxu0 0.0
  %1210 = vmatpush1.msra.mxu0 0.0
  %1211 = vmatprep.subr.mxu0 0.0
  %1212 = vmatpush1.msra.mxu0 0.0
  %1213 = vmatprep.subr.mxu0 0.0
  %1214 = vmatpush1.msra.mxu0 0.0
  %1215 = vmatprep.subr.mxu0 0.0
  %1216 = vmatpush1.msra.mxu0 0.0
  %1217 = vmatprep.subr.mxu0 0.0
  %1218 = vmatpush1.msra.mxu0 0.0
  %1219 = vmatprep.subr.mxu0 0.0
  %1220 = vmatpush1.msra.mxu0 0.0
  %1221 = vmatprep.subr.mxu0 0.0
  %1222 = vmatpush1.msra.mxu0 0.0
  %1223 = vmatprep.subr.mxu0 0.0
  %1224 = vmatpush1.msra.mxu0 0.0
  %1225 = vmatprep.subr.mxu0 0.0
  %1226 = vmatpush1.msra.mxu0 0.0
  %1227 = vmatprep.subr.mxu0 0.0
  %1228 = vmatpush1.msra.mxu0 0.0
  %1229 = vmatprep.subr.mxu0 0.0
  %1230 = vmatpush1.msra.mxu0 0.0
  %1231 = vmatprep.subr.mxu0 0.0
  %1232 = vmatpush1.msra.mxu0 0.0
  %1233 = vmatprep.subr.mxu0 0.0
  %1234 = vmatpush1.msra.mxu0 0.0
  %1235 = vmatprep.subr.mxu0 0.0
  %1236 = vmatpush1.msra.mxu0 0.0
  %1237 = vmatprep.subr.mxu0 0.0
  %1238 = vmatpush1.msra.mxu0 0.0
  %1239 = vmatprep.subr.mxu0 0.0
  %1240 = vmatpush1.msra.mxu0 0.0
  %1241 = vmatprep.subr.mxu0 0.0
  %1242 = vmatpush1.msra.mxu0 0.0
  %1243 = vmatprep.subr.mxu0 0.0
  %1244 = vmatpush1.msra.mxu0 0.0
  %1245 = vmatprep.subr.mxu0 0.0
  %1246 = vmatpush1.msra.mxu0 0.0
  %1247 = vmatprep.subr.mxu0 0.0
  %1248 = vmatpush1.msra.mxu0 0.0
  %1249 = vmatprep.subr.mxu0 0.0
  %1250 = vmatpush1.msra.mxu0 0.0
  %1251 = vmatprep.subr.mxu0 0.0
  %1252 = vmatpush1.msra.mxu0 0.0
  %1253 = vmatprep.subr.mxu0 0.0
  %1254 = vmatpush1.msra.mxu0 0.0
  %1255 = vmatprep.mubr.f32.mxu0 0.0
  %1256 = vmatmul.mubr.f32.gmra.mrb[0].mxu0 %v1168
  %v1257 = vpop.f32.mrb[0].mxu0
  %v1258 = vadd.f32 0.0, %v1257
  %v1259 = vpop.f32.mrb[0].mxu0
  %1260 = vmatprep.mubr.f32.mxu0 0.0
  %1261 = vmatmul.mubr.f32.gmra.mrb[0].mxu0 %v1171
  %v1262 = vpop.f32.mrb[0].mxu0
  %v1263 = vadd.f32 0.0, %v1262
  %v1264 = vpop.f32.mrb[0].mxu0
  %1265 = vmatprep.mubr.f32.mxu0 0.0
  %1266 = vmatmul.mubr.f32.gmra.mrb[0].mxu0 %v1174
  %v1267 = vpop.f32.mrb[0].mxu0
  %v1268 = vadd.f32 0.0, %v1267
  %v1269 = vpop.f32.mrb[0].mxu0
  %1270 = vmatprep.mubr.f32.mxu0 0.0
  %1271 = vmatmul.mubr.f32.gmra.mrb[0].mxu0 %v1177
  %v1272 = vpop.f32.mrb[0].mxu0
  %v1273 = vadd.f32 0.0, %v1272
  %v1274 = vpop.f32.mrb[0].mxu0
  %1275 = vmatprep.mubr.f32.mxu0 0.0
  %1276 = vmatmul.mubr.f32.gmra.mrb[0].mxu0 %v1180
  %v1277 = vpop.f32.mrb[0].mxu0
  %v1278 = vadd.f32 0.0, %v1277
  %v1279 = vpop.f32.mrb[0].mxu0
  %1280 = vmatprep.mubr.f32.mxu0 0.0
  %1281 = vmatmul.mubr.f32.gmra.mrb[0].mxu0 %v1183
  %v1282 = vpop.f32.mrb[0].mxu0
  %v1283 = vadd.f32 0.0, %v1282
  %v1284 = vpop.f32.mrb[0].mxu0
  %1285 = vmatprep.mubr.f32.mxu0 0.0
  %1286 = vmatmul.mubr.f32.gmra.mrb[0].mxu0 %v1186
  %v1287 = vpop.f32.mrb[0].mxu0
  %v1288 = vadd.f32 0.0, %v1287
  %v1289 = vpop.f32.mrb[0].mxu0
  %1290 = vmatprep.mubr.f32.mxu0 0.0
  %1291 = vmatmul.mubr.f32.gmra.mrb[0].mxu0 %v1189
  %v1292 = vpop.f32.mrb[0].mxu0
  %v1293 = vadd.f32 0.0, %v1292
  %v1294 = vpop.f32.mrb[0].mxu0
  %1295 = vdwg.mxu0
  %v1297 = vsel %vm650, %v570, 0
  %v1300 = vsel %vm650, %v571, 0
  %v1303 = vsel %vm650, %v572, 0
  %v1306 = vsel %vm650, %v573, 0
  %v1309 = vsel %vm650, %v574, 0
  %v1312 = vsel %vm650, %v575, 0
  %v1315 = vsel %vm650, %v576, 0
  %v1318 = vsel %vm650, %v577, 0
  %1320 = vmatprep.subr.mxu0 0.0
  %1321 = vmatpush1.msra.mxu0 %v361
  %1322 = vmatprep.subr.mxu0 0.0
  %1323 = vmatpush1.msra.mxu0 0.0
  %1324 = vmatprep.subr.mxu0 0.0
  %1325 = vmatpush1.msra.mxu0 0.0
  %1326 = vmatprep.subr.mxu0 0.0
  %1327 = vmatpush1.msra.mxu0 0.0
  %1328 = vmatprep.subr.mxu0 0.0
  %1329 = vmatpush1.msra.mxu0 0.0
  %1330 = vmatprep.subr.mxu0 0.0
  %1331 = vmatpush1.msra.mxu0 0.0
  %1332 = vmatprep.subr.mxu0 0.0
  %1333 = vmatpush1.msra.mxu0 0.0
  %1334 = vmatprep.subr.mxu0 0.0
  %1335 = vmatpush1.msra.mxu0 0.0
  %1336 = vmatprep.subr.mxu0 0.0
  %1337 = vmatpush1.msra.mxu0 0.0
  %1338 = vmatprep.subr.mxu0 0.0
  %1339 = vmatpush1.msra.mxu0 0.0
  %1340 = vmatprep.subr.mxu0 0.0
  %1341 = vmatpush1.msra.mxu0 0.0
  %1342 = vmatprep.subr.mxu0 0.0
  %1343 = vmatpush1.msra.mxu0 0.0
  %1344 = vmatprep.subr.mxu0 0.0
  %1345 = vmatpush1.msra.mxu0 0.0
  %1346 = vmatprep.subr.mxu0 0.0
  %1347 = vmatpush1.msra.mxu0 0.0
  %1348 = vmatprep.subr.mxu0 0.0
  %1349 = vmatpush1.msra.mxu0 0.0
  %1350 = vmatprep.subr.mxu0 0.0
  %1351 = vmatpush1.msra.mxu0 0.0
  %1352 = vmatprep.subr.mxu0 0.0
  %1353 = vmatpush1.msra.mxu0 0.0
  %1354 = vmatprep.subr.mxu0 0.0
  %1355 = vmatpush1.msra.mxu0 0.0
  %1356 = vmatprep.subr.mxu0 0.0
  %1357 = vmatpush1.msra.mxu0 0.0
  %1358 = vmatprep.subr.mxu0 0.0
  %1359 = vmatpush1.msra.mxu0 0.0
  %1360 = vmatprep.subr.mxu0 0.0
  %1361 = vmatpush1.msra.mxu0 0.0
  %1362 = vmatprep.subr.mxu0 0.0
  %1363 = vmatpush1.msra.mxu0 0.0
  %1364 = vmatprep.subr.mxu0 0.0
  %1365 = vmatpush1.msra.mxu0 0.0
  %1366 = vmatprep.subr.mxu0 0.0
  %1367 = vmatpush1.msra.mxu0 0.0
  %1368 = vmatprep.subr.mxu0 0.0
  %1369 = vmatpush1.msra.mxu0 0.0
  %1370 = vmatprep.subr.mxu0 0.0
  %1371 = vmatpush1.msra.mxu0 0.0
  %1372 = vmatprep.subr.mxu0 0.0
  %1373 = vmatpush1.msra.mxu0 0.0
  %1374 = vmatprep.subr.mxu0 0.0
  %1375 = vmatpush1.msra.mxu0 0.0
  %1376 = vmatprep.subr.mxu0 0.0
  %1377 = vmatpush1.msra.mxu0 0.0
  %1378 = vmatprep.subr.mxu0 0.0
  %1379 = vmatpush1.msra.mxu0 0.0
  %1380 = vmatprep.subr.mxu0 0.0
  %1381 = vmatpush1.msra.mxu0 0.0
  %1382 = vmatprep.subr.mxu0 0.0
  %1383 = vmatpush1.msra.mxu0 0.0
  %1384 = vmatprep.mubr.f32.mxu0 0.0
  %1385 = vmatmul.mubr.f32.gmra.mrb[0].mxu0 %v1297
  %v1386 = vpop.f32.mrb[0].mxu0
  %v1387 = vadd.f32 0.0, %v1386
  %v1388 = vpop.f32.mrb[0].mxu0
  %1389 = vmatprep.mubr.f32.mxu0 0.0
  %1390 = vmatmul.mubr.f32.gmra.mrb[0].mxu0 %v1300
  %v1391 = vpop.f32.mrb[0].mxu0
  %v1392 = vadd.f32 0.0, %v1391
  %v1393 = vpop.f32.mrb[0].mxu0
  %1394 = vmatprep.mubr.f32.mxu0 0.0
  %1395 = vmatmul.mubr.f32.gmra.mrb[0].mxu0 %v1303
  %v1396 = vpop.f32.mrb[0].mxu0
  %v1397 = vadd.f32 0.0, %v1396
  %v1398 = vpop.f32.mrb[0].mxu0
  %1399 = vmatprep.mubr.f32.mxu0 0.0
  %1400 = vmatmul.mubr.f32.gmra.mrb[0].mxu0 %v1306
  %v1401 = vpop.f32.mrb[0].mxu0
  %v1402 = vadd.f32 0.0, %v1401
  %v1403 = vpop.f32.mrb[0].mxu0
  %1404 = vmatprep.mubr.f32.mxu0 0.0
  %1405 = vmatmul.mubr.f32.gmra.mrb[0].mxu0 %v1309
  %v1406 = vpop.f32.mrb[0].mxu0
  %v1407 = vadd.f32 0.0, %v1406
  %v1408 = vpop.f32.mrb[0].mxu0
  %1409 = vmatprep.mubr.f32.mxu0 0.0
  %1410 = vmatmul.mubr.f32.gmra.mrb[0].mxu0 %v1312
  %v1411 = vpop.f32.mrb[0].mxu0
  %v1412 = vadd.f32 0.0, %v1411
  %v1413 = vpop.f32.mrb[0].mxu0
  %1414 = vmatprep.mubr.f32.mxu0 0.0
  %1415 = vmatmul.mubr.f32.gmra.mrb[0].mxu0 %v1315
  %v1416 = vpop.f32.mrb[0].mxu0
  %v1417 = vadd.f32 0.0, %v1416
  %v1418 = vpop.f32.mrb[0].mxu0
  %1419 = vmatprep.mubr.f32.mxu0 0.0
  %1420 = vmatmul.mubr.f32.gmra.mrb[0].mxu0 %v1318
  %v1421 = vpop.f32.mrb[0].mxu0
  %v1422 = vadd.f32 0.0, %v1421
  %v1423 = vpop.f32.mrb[0].mxu0
  %1424 = vdwg.mxu0
  %v1426 = vsel %vm650, %v602, 0
  %v1429 = vsel %vm650, %v603, 0
  %v1432 = vsel %vm650, %v604, 0
  %v1435 = vsel %vm650, %v605, 0
  %v1438 = vsel %vm650, %v606, 0
  %v1441 = vsel %vm650, %v607, 0
  %v1444 = vsel %vm650, %v608, 0
  %v1447 = vsel %vm650, %v609, 0
  %1449 = vmatprep.subr.mxu0 0.0
  %1450 = vmatpush1.msra.mxu0 %v366
  %1451 = vmatprep.subr.mxu0 0.0
  %1452 = vmatpush1.msra.mxu0 0.0
  %1453 = vmatprep.subr.mxu0 0.0
  %1454 = vmatpush1.msra.mxu0 0.0
  %1455 = vmatprep.subr.mxu0 0.0
  %1456 = vmatpush1.msra.mxu0 0.0
  %1457 = vmatprep.subr.mxu0 0.0
  %1458 = vmatpush1.msra.mxu0 0.0
  %1459 = vmatprep.subr.mxu0 0.0
  %1460 = vmatpush1.msra.mxu0 0.0
  %1461 = vmatprep.subr.mxu0 0.0
  %1462 = vmatpush1.msra.mxu0 0.0
  %1463 = vmatprep.subr.mxu0 0.0
  %1464 = vmatpush1.msra.mxu0 0.0
  %1465 = vmatprep.subr.mxu0 0.0
  %1466 = vmatpush1.msra.mxu0 0.0
  %1467 = vmatprep.subr.mxu0 0.0
  %1468 = vmatpush1.msra.mxu0 0.0
  %1469 = vmatprep.subr.mxu0 0.0
  %1470 = vmatpush1.msra.mxu0 0.0
  %1471 = vmatprep.subr.mxu0 0.0
  %1472 = vmatpush1.msra.mxu0 0.0
  %1473 = vmatprep.subr.mxu0 0.0
  %1474 = vmatpush1.msra.mxu0 0.0
  %1475 = vmatprep.subr.mxu0 0.0
  %1476 = vmatpush1.msra.mxu0 0.0
  %1477 = vmatprep.subr.mxu0 0.0
  %1478 = vmatpush1.msra.mxu0 0.0
  %1479 = vmatprep.subr.mxu0 0.0
  %1480 = vmatpush1.msra.mxu0 0.0
  %1481 = vmatprep.subr.mxu0 0.0
  %1482 = vmatpush1.msra.mxu0 0.0
  %1483 = vmatprep.subr.mxu0 0.0
  %1484 = vmatpush1.msra.mxu0 0.0
  %1485 = vmatprep.subr.mxu0 0.0
  %1486 = vmatpush1.msra.mxu0 0.0
  %1487 = vmatprep.subr.mxu0 0.0
  %1488 = vmatpush1.msra.mxu0 0.0
  %1489 = vmatprep.subr.mxu0 0.0
  %1490 = vmatpush1.msra.mxu0 0.0
  %1491 = vmatprep.subr.mxu0 0.0
  %1492 = vmatpush1.msra.mxu0 0.0
  %1493 = vmatprep.subr.mxu0 0.0
  %1494 = vmatpush1.msra.mxu0 0.0
  %1495 = vmatprep.subr.mxu0 0.0
  %1496 = vmatpush1.msra.mxu0 0.0
  %1497 = vmatprep.subr.mxu0 0.0
  %1498 = vmatpush1.msra.mxu0 0.0
  %1499 = vmatprep.subr.mxu0 0.0
  %1500 = vmatpush1.msra.mxu0 0.0
  %1501 = vmatprep.subr.mxu0 0.0
  %1502 = vmatpush1.msra.mxu0 0.0
  %1503 = vmatprep.subr.mxu0 0.0
  %1504 = vmatpush1.msra.mxu0 0.0
  %1505 = vmatprep.subr.mxu0 0.0
  %1506 = vmatpush1.msra.mxu0 0.0
  %1507 = vmatprep.subr.mxu0 0.0
  %1508 = vmatpush1.msra.mxu0 0.0
  %1509 = vmatprep.subr.mxu0 0.0
  %1510 = vmatpush1.msra.mxu0 0.0
  %1511 = vmatprep.subr.mxu0 0.0
  %1512 = vmatpush1.msra.mxu0 0.0
  %1513 = vmatprep.mubr.f32.mxu0 0.0
  %1514 = vmatmul.mubr.f32.gmra.mrb[0].mxu0 %v1426
  %v1515 = vpop.f32.mrb[0].mxu0
  %v1516 = vadd.f32 0.0, %v1515
  %v1517 = vpop.f32.mrb[0].mxu0
  %1518 = vmatprep.mubr.f32.mxu0 0.0
  %1519 = vmatmul.mubr.f32.gmra.mrb[0].mxu0 %v1429
  %v1520 = vpop.f32.mrb[0].mxu0
  %v1521 = vadd.f32 0.0, %v1520
  %v1522 = vpop.f32.mrb[0].mxu0
  %1523 = vmatprep.mubr.f32.mxu0 0.0
  %1524 = vmatmul.mubr.f32.gmra.mrb[0].mxu0 %v1432
  %v1525 = vpop.f32.mrb[0].mxu0
  %v1526 = vadd.f32 0.0, %v1525
  %v1527 = vpop.f32.mrb[0].mxu0
  %1528 = vmatprep.mubr.f32.mxu0 0.0
  %1529 = vmatmul.mubr.f32.gmra.mrb[0].mxu0 %v1435
  %v1530 = vpop.f32.mrb[0].mxu0
  %v1531 = vadd.f32 0.0, %v1530
  %v1532 = vpop.f32.mrb[0].mxu0
  %1533 = vmatprep.mubr.f32.mxu0 0.0
  %1534 = vmatmul.mubr.f32.gmra.mrb[0].mxu0 %v1438
  %v1535 = vpop.f32.mrb[0].mxu0
  %v1536 = vadd.f32 0.0, %v1535
  %v1537 = vpop.f32.mrb[0].mxu0
  %1538 = vmatprep.mubr.f32.mxu0 0.0
  %1539 = vmatmul.mubr.f32.gmra.mrb[0].mxu0 %v1441
  %v1540 = vpop.f32.mrb[0].mxu0
  %v1541 = vadd.f32 0.0, %v1540
  %v1542 = vpop.f32.mrb[0].mxu0
  %1543 = vmatprep.mubr.f32.mxu0 0.0
  %1544 = vmatmul.mubr.f32.gmra.mrb[0].mxu0 %v1444
  %v1545 = vpop.f32.mrb[0].mxu0
  %v1546 = vadd.f32 0.0, %v1545
  %v1547 = vpop.f32.mrb[0].mxu0
  %1548 = vmatprep.mubr.f32.mxu0 0.0
  %1549 = vmatmul.mubr.f32.gmra.mrb[0].mxu0 %v1447
  %v1550 = vpop.f32.mrb[0].mxu0
  %v1551 = vadd.f32 0.0, %v1550
  %v1552 = vpop.f32.mrb[0].mxu0
  %1553 = vdwg.mxu0
  %v1555 = vsel %vm650, %v634, 0
  %v1558 = vsel %vm650, %v635, 0
  %v1561 = vsel %vm650, %v636, 0
  %v1564 = vsel %vm650, %v637, 0
  %v1567 = vsel %vm650, %v638, 0
  %v1570 = vsel %vm650, %v639, 0
  %v1573 = vsel %vm650, %v640, 0
  %v1576 = vsel %vm650, %v641, 0
  %1578 = vmatprep.subr.mxu0 0.0
  %1579 = vmatpush1.msra.mxu0 %v371
  %1580 = vmatprep.subr.mxu0 0.0
  %1581 = vmatpush1.msra.mxu0 0.0
  %1582 = vmatprep.subr.mxu0 0.0
  %1583 = vmatpush1.msra.mxu0 0.0
  %1584 = vmatprep.subr.mxu0 0.0
  %1585 = vmatpush1.msra.mxu0 0.0
  %1586 = vmatprep.subr.mxu0 0.0
  %1587 = vmatpush1.msra.mxu0 0.0
  %1588 = vmatprep.subr.mxu0 0.0
  %1589 = vmatpush1.msra.mxu0 0.0
  %1590 = vmatprep.subr.mxu0 0.0
  %1591 = vmatpush1.msra.mxu0 0.0
  %1592 = vmatprep.subr.mxu0 0.0
  %1593 = vmatpush1.msra.mxu0 0.0
  %1594 = vmatprep.subr.mxu0 0.0
  %1595 = vmatpush1.msra.mxu0 0.0
  %1596 = vmatprep.subr.mxu0 0.0
  %1597 = vmatpush1.msra.mxu0 0.0
  %1598 = vmatprep.subr.mxu0 0.0
  %1599 = vmatpush1.msra.mxu0 0.0
  %1600 = vmatprep.subr.mxu0 0.0
  %1601 = vmatpush1.msra.mxu0 0.0
  %1602 = vmatprep.subr.mxu0 0.0
  %1603 = vmatpush1.msra.mxu0 0.0
  %1604 = vmatprep.subr.mxu0 0.0
  %1605 = vmatpush1.msra.mxu0 0.0
  %1606 = vmatprep.subr.mxu0 0.0
  %1607 = vmatpush1.msra.mxu0 0.0
  %1608 = vmatprep.subr.mxu0 0.0
  %1609 = vmatpush1.msra.mxu0 0.0
  %1610 = vmatprep.subr.mxu0 0.0
  %1611 = vmatpush1.msra.mxu0 0.0
  %1612 = vmatprep.subr.mxu0 0.0
  %1613 = vmatpush1.msra.mxu0 0.0
  %1614 = vmatprep.subr.mxu0 0.0
  %1615 = vmatpush1.msra.mxu0 0.0
  %1616 = vmatprep.subr.mxu0 0.0
  %1617 = vmatpush1.msra.mxu0 0.0
  %1618 = vmatprep.subr.mxu0 0.0
  %1619 = vmatpush1.msra.mxu0 0.0
  %1620 = vmatprep.subr.mxu0 0.0
  %1621 = vmatpush1.msra.mxu0 0.0
  %1622 = vmatprep.subr.mxu0 0.0
  %1623 = vmatpush1.msra.mxu0 0.0
  %1624 = vmatprep.subr.mxu0 0.0
  %1625 = vmatpush1.msra.mxu0 0.0
  %1626 = vmatprep.subr.mxu0 0.0
  %1627 = vmatpush1.msra.mxu0 0.0
  %1628 = vmatprep.subr.mxu0 0.0
  %1629 = vmatpush1.msra.mxu0 0.0
  %1630 = vmatprep.subr.mxu0 0.0
  %1631 = vmatpush1.msra.mxu0 0.0
  %1632 = vmatprep.subr.mxu0 0.0
  %1633 = vmatpush1.msra.mxu0 0.0
  %1634 = vmatprep.subr.mxu0 0.0
  %1635 = vmatpush1.msra.mxu0 0.0
  %1636 = vmatprep.subr.mxu0 0.0
  %1637 = vmatpush1.msra.mxu0 0.0
  %1638 = vmatprep.subr.mxu0 0.0
  %1639 = vmatpush1.msra.mxu0 0.0
  %1640 = vmatprep.subr.mxu0 0.0
  %1641 = vmatpush1.msra.mxu0 0.0
  %1642 = vmatprep.mubr.f32.mxu0 0.0
  %1643 = vmatmul.mubr.f32.gmra.mrb[0].mxu0 %v1555
  %v1644 = vpop.f32.mrb[0].mxu0
  %v1645 = vadd.f32 0.0, %v1644
  %v1646 = vpop.f32.mrb[0].mxu0
  %1647 = vmatprep.mubr.f32.mxu0 0.0
  %1648 = vmatmul.mubr.f32.gmra.mrb[0].mxu0 %v1558
  %v1649 = vpop.f32.mrb[0].mxu0
  %v1650 = vadd.f32 0.0, %v1649
  %v1651 = vpop.f32.mrb[0].mxu0
  %1652 = vmatprep.mubr.f32.mxu0 0.0
  %1653 = vmatmul.mubr.f32.gmra.mrb[0].mxu0 %v1561
  %v1654 = vpop.f32.mrb[0].mxu0
  %v1655 = vadd.f32 0.0, %v1654
  %v1656 = vpop.f32.mrb[0].mxu0
  %1657 = vmatprep.mubr.f32.mxu0 0.0
  %1658 = vmatmul.mubr.f32.gmra.mrb[0].mxu0 %v1564
  %v1659 = vpop.f32.mrb[0].mxu0
  %v1660 = vadd.f32 0.0, %v1659
  %v1661 = vpop.f32.mrb[0].mxu0
  %1662 = vmatprep.mubr.f32.mxu0 0.0
  %1663 = vmatmul.mubr.f32.gmra.mrb[0].mxu0 %v1567
  %v1664 = vpop.f32.mrb[0].mxu0
  %v1665 = vadd.f32 0.0, %v1664
  %v1666 = vpop.f32.mrb[0].mxu0
  %1667 = vmatprep.mubr.f32.mxu0 0.0
  %1668 = vmatmul.mubr.f32.gmra.mrb[0].mxu0 %v1570
  %v1669 = vpop.f32.mrb[0].mxu0
  %v1670 = vadd.f32 0.0, %v1669
  %v1671 = vpop.f32.mrb[0].mxu0
  %1672 = vmatprep.mubr.f32.mxu0 0.0
  %1673 = vmatmul.mubr.f32.gmra.mrb[0].mxu0 %v1573
  %v1674 = vpop.f32.mrb[0].mxu0
  %v1675 = vadd.f32 0.0, %v1674
  %v1676 = vpop.f32.mrb[0].mxu0
  %1677 = vmatprep.mubr.f32.mxu0 0.0
  %1678 = vmatmul.mubr.f32.gmra.mrb[0].mxu0 %v1576
  %v1679 = vpop.f32.mrb[0].mxu0
  %v1680 = vadd.f32 0.0, %v1679
  %v1681 = vpop.f32.mrb[0].mxu0
  %1682 = vdwg.mxu0
  %vm1683 = vcmask 523264
  %v1684 = vsel %vm1683, %v742, -inf
  %1685 = vmax.xlane.f32.xlu0 %v1684
  %v1686 = vpop.xlane.xlu0 %1685
  %v1687 = vsel %vm1683, %v747, -inf
  %1688 = vmax.xlane.f32.xlu0 %v1687
  %v1689 = vpop.xlane.xlu0 %1688
  %v1690 = vsel %vm1683, %v752, -inf
  %1691 = vmax.xlane.f32.xlu0 %v1690
  %v1692 = vpop.xlane.xlu0 %1691
  %v1693 = vsel %vm1683, %v757, -inf
  %1694 = vmax.xlane.f32.xlu0 %v1693
  %v1695 = vpop.xlane.xlu0 %1694
  %v1696 = vsel %vm1683, %v762, -inf
  %1697 = vmax.xlane.f32.xlu0 %v1696
  %v1698 = vpop.xlane.xlu0 %1697
  %v1699 = vsel %vm1683, %v767, -inf
  %1700 = vmax.xlane.f32.xlu0 %v1699
  %v1701 = vpop.xlane.xlu0 %1700
  %v1702 = vsel %vm1683, %v772, -inf
  %1703 = vmax.xlane.f32.xlu0 %v1702
  %v1704 = vpop.xlane.xlu0 %1703
  %v1705 = vsel %vm1683, %v777, -inf
  %1706 = vmax.xlane.f32.xlu0 %v1705
  %v1707 = vpop.xlane.xlu0 %1706
  %v1708 = vsel %vm1683, %v871, -inf
  %1709 = vmax.xlane.f32.xlu0 %v1708
  %v1710 = vpop.xlane.xlu0 %1709
  %v1711 = vsel %vm1683, %v876, -inf
  %1712 = vmax.xlane.f32.xlu0 %v1711
  %v1713 = vpop.xlane.xlu0 %1712
  %v1714 = vsel %vm1683, %v881, -inf
  %1715 = vmax.xlane.f32.xlu0 %v1714
  %v1716 = vpop.xlane.xlu0 %1715
  %v1717 = vsel %vm1683, %v886, -inf
  %1718 = vmax.xlane.f32.xlu0 %v1717
  %v1719 = vpop.xlane.xlu0 %1718
  %v1720 = vsel %vm1683, %v891, -inf
  %1721 = vmax.xlane.f32.xlu0 %v1720
  %v1722 = vpop.xlane.xlu0 %1721
  %v1723 = vsel %vm1683, %v896, -inf
  %1724 = vmax.xlane.f32.xlu0 %v1723
  %v1725 = vpop.xlane.xlu0 %1724
  %v1726 = vsel %vm1683, %v901, -inf
  %1727 = vmax.xlane.f32.xlu0 %v1726
  %v1728 = vpop.xlane.xlu0 %1727
  %v1729 = vsel %vm1683, %v906, -inf
  %1730 = vmax.xlane.f32.xlu0 %v1729
  %v1731 = vpop.xlane.xlu0 %1730
  %v1732 = vsel %vm1683, %v1000, -inf
  %1733 = vmax.xlane.f32.xlu0 %v1732
  %v1734 = vpop.xlane.xlu0 %1733
  %v1735 = vsel %vm1683, %v1005, -inf
  %1736 = vmax.xlane.f32.xlu0 %v1735
  %v1737 = vpop.xlane.xlu0 %1736
  %v1738 = vsel %vm1683, %v1010, -inf
  %1739 = vmax.xlane.f32.xlu0 %v1738
  %v1740 = vpop.xlane.xlu0 %1739
  %v1741 = vsel %vm1683, %v1015, -inf
  %1742 = vmax.xlane.f32.xlu0 %v1741
  %v1743 = vpop.xlane.xlu0 %1742
  %v1744 = vsel %vm1683, %v1020, -inf
  %1745 = vmax.xlane.f32.xlu0 %v1744
  %v1746 = vpop.xlane.xlu0 %1745
  %v1747 = vsel %vm1683, %v1025, -inf
  %1748 = vmax.xlane.f32.xlu0 %v1747
  %v1749 = vpop.xlane.xlu0 %1748
  %v1750 = vsel %vm1683, %v1030, -inf
  %1751 = vmax.xlane.f32.xlu0 %v1750
  %v1752 = vpop.xlane.xlu0 %1751
  %v1753 = vsel %vm1683, %v1035, -inf
  %1754 = vmax.xlane.f32.xlu0 %v1753
  %v1755 = vpop.xlane.xlu0 %1754
  %v1756 = vsel %vm1683, %v1129, -inf
  %1757 = vmax.xlane.f32.xlu0 %v1756
  %v1758 = vpop.xlane.xlu0 %1757
  %v1759 = vsel %vm1683, %v1134, -inf
  %1760 = vmax.xlane.f32.xlu0 %v1759
  %v1761 = vpop.xlane.xlu0 %1760
  %v1762 = vsel %vm1683, %v1139, -inf
  %1763 = vmax.xlane.f32.xlu0 %v1762
  %v1764 = vpop.xlane.xlu0 %1763
  %v1765 = vsel %vm1683, %v1144, -inf
  %1766 = vmax.xlane.f32.xlu0 %v1765
  %v1767 = vpop.xlane.xlu0 %1766
  %v1768 = vsel %vm1683, %v1149, -inf
  %1769 = vmax.xlane.f32.xlu0 %v1768
  %v1770 = vpop.xlane.xlu0 %1769
  %v1771 = vsel %vm1683, %v1154, -inf
  %1772 = vmax.xlane.f32.xlu0 %v1771
  %v1773 = vpop.xlane.xlu0 %1772
  %v1774 = vsel %vm1683, %v1159, -inf
  %1775 = vmax.xlane.f32.xlu0 %v1774
  %v1776 = vpop.xlane.xlu0 %1775
  %v1777 = vsel %vm1683, %v1164, -inf
  %1778 = vmax.xlane.f32.xlu0 %v1777
  %v1779 = vpop.xlane.xlu0 %1778
  %v1780 = vsel %vm1683, %v1258, -inf
  %1781 = vmax.xlane.f32.xlu0 %v1780
  %v1782 = vpop.xlane.xlu0 %1781
  %v1783 = vsel %vm1683, %v1263, -inf
  %1784 = vmax.xlane.f32.xlu0 %v1783
  %v1785 = vpop.xlane.xlu0 %1784
  %v1786 = vsel %vm1683, %v1268, -inf
  %1787 = vmax.xlane.f32.xlu0 %v1786
  %v1788 = vpop.xlane.xlu0 %1787
  %v1789 = vsel %vm1683, %v1273, -inf
  %1790 = vmax.xlane.f32.xlu0 %v1789
  %v1791 = vpop.xlane.xlu0 %1790
  %v1792 = vsel %vm1683, %v1278, -inf
  %1793 = vmax.xlane.f32.xlu0 %v1792
  %v1794 = vpop.xlane.xlu0 %1793
  %v1795 = vsel %vm1683, %v1283, -inf
  %1796 = vmax.xlane.f32.xlu0 %v1795
  %v1797 = vpop.xlane.xlu0 %1796
  %v1798 = vsel %vm1683, %v1288, -inf
  %1799 = vmax.xlane.f32.xlu0 %v1798
  %v1800 = vpop.xlane.xlu0 %1799
  %v1801 = vsel %vm1683, %v1293, -inf
  %1802 = vmax.xlane.f32.xlu0 %v1801
  %v1803 = vpop.xlane.xlu0 %1802
  %v1804 = vsel %vm1683, %v1387, -inf
  %1805 = vmax.xlane.f32.xlu0 %v1804
  %v1806 = vpop.xlane.xlu0 %1805
  %v1807 = vsel %vm1683, %v1392, -inf
  %1808 = vmax.xlane.f32.xlu0 %v1807
  %v1809 = vpop.xlane.xlu0 %1808
  %v1810 = vsel %vm1683, %v1397, -inf
  %1811 = vmax.xlane.f32.xlu0 %v1810
  %v1812 = vpop.xlane.xlu0 %1811
  %v1813 = vsel %vm1683, %v1402, -inf
  %1814 = vmax.xlane.f32.xlu0 %v1813
  %v1815 = vpop.xlane.xlu0 %1814
  %v1816 = vsel %vm1683, %v1407, -inf
  %1817 = vmax.xlane.f32.xlu0 %v1816
  %v1818 = vpop.xlane.xlu0 %1817
  %v1819 = vsel %vm1683, %v1412, -inf
  %1820 = vmax.xlane.f32.xlu0 %v1819
  %v1821 = vpop.xlane.xlu0 %1820
  %v1822 = vsel %vm1683, %v1417, -inf
  %1823 = vmax.xlane.f32.xlu0 %v1822
  %v1824 = vpop.xlane.xlu0 %1823
  %v1825 = vsel %vm1683, %v1422, -inf
  %1826 = vmax.xlane.f32.xlu0 %v1825
  %v1827 = vpop.xlane.xlu0 %1826
  %v1828 = vsel %vm1683, %v1516, -inf
  %1829 = vmax.xlane.f32.xlu0 %v1828
  %v1830 = vpop.xlane.xlu0 %1829
  %v1831 = vsel %vm1683, %v1521, -inf
  %1832 = vmax.xlane.f32.xlu0 %v1831
  %v1833 = vpop.xlane.xlu0 %1832
  %v1834 = vsel %vm1683, %v1526, -inf
  %1835 = vmax.xlane.f32.xlu0 %v1834
  %v1836 = vpop.xlane.xlu0 %1835
  %v1837 = vsel %vm1683, %v1531, -inf
  %1838 = vmax.xlane.f32.xlu0 %v1837
  %v1839 = vpop.xlane.xlu0 %1838
  %v1840 = vsel %vm1683, %v1536, -inf
  %1841 = vmax.xlane.f32.xlu0 %v1840
  %v1842 = vpop.xlane.xlu0 %1841
  %v1843 = vsel %vm1683, %v1541, -inf
  %1844 = vmax.xlane.f32.xlu0 %v1843
  %v1845 = vpop.xlane.xlu0 %1844
  %v1846 = vsel %vm1683, %v1546, -inf
  %1847 = vmax.xlane.f32.xlu0 %v1846
  %v1848 = vpop.xlane.xlu0 %1847
  %v1849 = vsel %vm1683, %v1551, -inf
  %1850 = vmax.xlane.f32.xlu0 %v1849
  %v1851 = vpop.xlane.xlu0 %1850
  %v1852 = vsel %vm1683, %v1645, -inf
  %1853 = vmax.xlane.f32.xlu0 %v1852
  %v1854 = vpop.xlane.xlu0 %1853
  %v1855 = vsel %vm1683, %v1650, -inf
  %1856 = vmax.xlane.f32.xlu0 %v1855
  %v1857 = vpop.xlane.xlu0 %1856
  %v1858 = vsel %vm1683, %v1655, -inf
  %1859 = vmax.xlane.f32.xlu0 %v1858
  %v1860 = vpop.xlane.xlu0 %1859
  %v1861 = vsel %vm1683, %v1660, -inf
  %1862 = vmax.xlane.f32.xlu0 %v1861
  %v1863 = vpop.xlane.xlu0 %1862
  %v1864 = vsel %vm1683, %v1665, -inf
  %1865 = vmax.xlane.f32.xlu0 %v1864
  %v1866 = vpop.xlane.xlu0 %1865
  %v1867 = vsel %vm1683, %v1670, -inf
  %1868 = vmax.xlane.f32.xlu0 %v1867
  %v1869 = vpop.xlane.xlu0 %1868
  %v1870 = vsel %vm1683, %v1675, -inf
  %1871 = vmax.xlane.f32.xlu0 %v1870
  %v1872 = vpop.xlane.xlu0 %1871
  %v1873 = vsel %vm1683, %v1680, -inf
  %1874 = vmax.xlane.f32.xlu0 %v1873
  %v1875 = vpop.xlane.xlu0 %1874
  %v1876 = vsub.f32 %v742, %v1686
  %v1877 = vsub.f32 %v747, %v1689
  %v1878 = vsub.f32 %v752, %v1692
  %v1879 = vsub.f32 %v757, %v1695
  %v1880 = vsub.f32 %v762, %v1698
  %v1881 = vsub.f32 %v767, %v1701
  %v1882 = vsub.f32 %v772, %v1704
  %v1883 = vsub.f32 %v777, %v1707
  %v1884 = vsub.f32 %v871, %v1710
  %v1885 = vsub.f32 %v876, %v1713
  %v1886 = vsub.f32 %v881, %v1716
  %v1887 = vsub.f32 %v886, %v1719
  %v1888 = vsub.f32 %v891, %v1722
  %v1889 = vsub.f32 %v896, %v1725
  %v1890 = vsub.f32 %v901, %v1728
  %v1891 = vsub.f32 %v906, %v1731
  %v1892 = vsub.f32 %v1000, %v1734
  %v1893 = vsub.f32 %v1005, %v1737
  %v1894 = vsub.f32 %v1010, %v1740
  %v1895 = vsub.f32 %v1015, %v1743
  %v1896 = vsub.f32 %v1020, %v1746
  %v1897 = vsub.f32 %v1025, %v1749
  %v1898 = vsub.f32 %v1030, %v1752
  %v1899 = vsub.f32 %v1035, %v1755
  %v1900 = vsub.f32 %v1129, %v1758
  %v1901 = vsub.f32 %v1134, %v1761
  %v1902 = vsub.f32 %v1139, %v1764
  %v1903 = vsub.f32 %v1144, %v1767
  %v1904 = vsub.f32 %v1149, %v1770
  %v1905 = vsub.f32 %v1154, %v1773
  %v1906 = vsub.f32 %v1159, %v1776
  %v1907 = vsub.f32 %v1164, %v1779
  %v1908 = vsub.f32 %v1258, %v1782
  %v1909 = vsub.f32 %v1263, %v1785
  %v1910 = vsub.f32 %v1268, %v1788
  %v1911 = vsub.f32 %v1273, %v1791
  %v1912 = vsub.f32 %v1278, %v1794
  %v1913 = vsub.f32 %v1283, %v1797
  %v1914 = vsub.f32 %v1288, %v1800
  %v1915 = vsub.f32 %v1293, %v1803
  %v1916 = vsub.f32 %v1387, %v1806
  %v1917 = vsub.f32 %v1392, %v1809
  %v1918 = vsub.f32 %v1397, %v1812
  %v1919 = vsub.f32 %v1402, %v1815
  %v1920 = vsub.f32 %v1407, %v1818
  %v1921 = vsub.f32 %v1412, %v1821
  %v1922 = vsub.f32 %v1417, %v1824
  %v1923 = vsub.f32 %v1422, %v1827
  %v1924 = vsub.f32 %v1516, %v1830
  %v1925 = vsub.f32 %v1521, %v1833
  %v1926 = vsub.f32 %v1526, %v1836
  %v1927 = vsub.f32 %v1531, %v1839
  %v1928 = vsub.f32 %v1536, %v1842
  %v1929 = vsub.f32 %v1541, %v1845
  %v1930 = vsub.f32 %v1546, %v1848
  %v1931 = vsub.f32 %v1551, %v1851
  %v1932 = vsub.f32 %v1645, %v1854
  %v1933 = vsub.f32 %v1650, %v1857
  %v1934 = vsub.f32 %v1655, %v1860
  %v1935 = vsub.f32 %v1660, %v1863
  %v1936 = vsub.f32 %v1665, %v1866
  %v1937 = vsub.f32 %v1670, %v1869
  %v1938 = vsub.f32 %v1675, %v1872
  %v1939 = vsub.f32 %v1680, %v1875
  %v1940 = vmul.f32 %v1876, 1.442695
  %v1941 = vpow.pop %v1940
  %v1942 = vmul.f32 %v1877, 1.442695
  %v1943 = vpow.pop %v1942
  %v1944 = vmul.f32 %v1878, 1.442695
  %v1945 = vpow.pop %v1944
  %v1946 = vmul.f32 %v1879, 1.442695
  %v1947 = vpow.pop %v1946
  %v1948 = vmul.f32 %v1880, 1.442695
  %v1949 = vpow.pop %v1948
  %v1950 = vmul.f32 %v1881, 1.442695
  %v1951 = vpow.pop %v1950
  %v1952 = vmul.f32 %v1882, 1.442695
  %v1953 = vpow.pop %v1952
  %v1954 = vmul.f32 %v1883, 1.442695
  %v1955 = vpow.pop %v1954
  %v1956 = vmul.f32 %v1884, 1.442695
  %v1957 = vpow.pop %v1956
  %v1958 = vmul.f32 %v1885, 1.442695
  %v1959 = vpow.pop %v1958
  %v1960 = vmul.f32 %v1886, 1.442695
  %v1961 = vpow.pop %v1960
  %v1962 = vmul.f32 %v1887, 1.442695
  %v1963 = vpow.pop %v1962
  %v1964 = vmul.f32 %v1888, 1.442695
  %v1965 = vpow.pop %v1964
  %v1966 = vmul.f32 %v1889, 1.442695
  %v1967 = vpow.pop %v1966
  %v1968 = vmul.f32 %v1890, 1.442695
  %v1969 = vpow.pop %v1968
  %v1970 = vmul.f32 %v1891, 1.442695
  %v1971 = vpow.pop %v1970
  %v1972 = vmul.f32 %v1892, 1.442695
  %v1973 = vpow.pop %v1972
  %v1974 = vmul.f32 %v1893, 1.442695
  %v1975 = vpow.pop %v1974
  %v1976 = vmul.f32 %v1894, 1.442695
  %v1977 = vpow.pop %v1976
  %v1978 = vmul.f32 %v1895, 1.442695
  %v1979 = vpow.pop %v1978
  %v1980 = vmul.f32 %v1896, 1.442695
  %v1981 = vpow.pop %v1980
  %v1982 = vmul.f32 %v1897, 1.442695
  %v1983 = vpow.pop %v1982
  %v1984 = vmul.f32 %v1898, 1.442695
  %v1985 = vpow.pop %v1984
  %v1986 = vmul.f32 %v1899, 1.442695
  %v1987 = vpow.pop %v1986
  %v1988 = vmul.f32 %v1900, 1.442695
  %v1989 = vpow.pop %v1988
  %v1990 = vmul.f32 %v1901, 1.442695
  %v1991 = vpow.pop %v1990
  %v1992 = vmul.f32 %v1902, 1.442695
  %v1993 = vpow.pop %v1992
  %v1994 = vmul.f32 %v1903, 1.442695
  %v1995 = vpow.pop %v1994
  %v1996 = vmul.f32 %v1904, 1.442695
  %v1997 = vpow.pop %v1996
  %v1998 = vmul.f32 %v1905, 1.442695
  %v1999 = vpow.pop %v1998
  %v2000 = vmul.f32 %v1906, 1.442695
  %v2001 = vpow.pop %v2000
  %v2002 = vmul.f32 %v1907, 1.442695
  %v2003 = vpow.pop %v2002
  %v2004 = vmul.f32 %v1908, 1.442695
  %v2005 = vpow.pop %v2004
  %v2006 = vmul.f32 %v1909, 1.442695
  %v2007 = vpow.pop %v2006
  %v2008 = vmul.f32 %v1910, 1.442695
  %v2009 = vpow.pop %v2008
  %v2010 = vmul.f32 %v1911, 1.442695
  %v2011 = vpow.pop %v2010
  %v2012 = vmul.f32 %v1912, 1.442695
  %v2013 = vpow.pop %v2012
  %v2014 = vmul.f32 %v1913, 1.442695
  %v2015 = vpow.pop %v2014
  %v2016 = vmul.f32 %v1914, 1.442695
  %v2017 = vpow.pop %v2016
  %v2018 = vmul.f32 %v1915, 1.442695
  %v2019 = vpow.pop %v2018
  %v2020 = vmul.f32 %v1916, 1.442695
  %v2021 = vpow.pop %v2020
  %v2022 = vmul.f32 %v1917, 1.442695
  %v2023 = vpow.pop %v2022
  %v2024 = vmul.f32 %v1918, 1.442695
  %v2025 = vpow.pop %v2024
  %v2026 = vmul.f32 %v1919, 1.442695
  %v2027 = vpow.pop %v2026
  %v2028 = vmul.f32 %v1920, 1.442695
  %v2029 = vpow.pop %v2028
  %v2030 = vmul.f32 %v1921, 1.442695
  %v2031 = vpow.pop %v2030
  %v2032 = vmul.f32 %v1922, 1.442695
  %v2033 = vpow.pop %v2032
  %v2034 = vmul.f32 %v1923, 1.442695
  %v2035 = vpow.pop %v2034
  %v2036 = vmul.f32 %v1924, 1.442695
  %v2037 = vpow.pop %v2036
  %v2038 = vmul.f32 %v1925, 1.442695
  %v2039 = vpow.pop %v2038
  %v2040 = vmul.f32 %v1926, 1.442695
  %v2041 = vpow.pop %v2040
  %v2042 = vmul.f32 %v1927, 1.442695
  %v2043 = vpow.pop %v2042
  %v2044 = vmul.f32 %v1928, 1.442695
  %v2045 = vpow.pop %v2044
  %v2046 = vmul.f32 %v1929, 1.442695
  %v2047 = vpow.pop %v2046
  %v2048 = vmul.f32 %v1930, 1.442695
  %v2049 = vpow.pop %v2048
  %v2050 = vmul.f32 %v1931, 1.442695
  %v2051 = vpow.pop %v2050
  %v2052 = vmul.f32 %v1932, 1.442695
  %v2053 = vpow.pop %v2052
  %v2054 = vmul.f32 %v1933, 1.442695
  %v2055 = vpow.pop %v2054
  %v2056 = vmul.f32 %v1934, 1.442695
  %v2057 = vpow.pop %v2056
  %v2058 = vmul.f32 %v1935, 1.442695
  %v2059 = vpow.pop %v2058
  %v2060 = vmul.f32 %v1936, 1.442695
  %v2061 = vpow.pop %v2060
  %v2062 = vmul.f32 %v1937, 1.442695
  %v2063 = vpow.pop %v2062
  %v2064 = vmul.f32 %v1938, 1.442695
  %v2065 = vpow.pop %v2064
  %v2066 = vmul.f32 %v1939, 1.442695
  %v2067 = vpow.pop %v2066
  %v2068 = vsel %vm1683, %v1941, 0.0
  %2069 = vadd.xlane.f32.xlu0 %v2068
  %v2070 = vpop.xlane.xlu0 %2069
  %v2071 = vsel %vm1683, %v1943, 0.0
  %2072 = vadd.xlane.f32.xlu0 %v2071
  %v2073 = vpop.xlane.xlu0 %2072
  %v2074 = vsel %vm1683, %v1945, 0.0
  %2075 = vadd.xlane.f32.xlu0 %v2074
  %v2076 = vpop.xlane.xlu0 %2075
  %v2077 = vsel %vm1683, %v1947, 0.0
  %2078 = vadd.xlane.f32.xlu0 %v2077
  %v2079 = vpop.xlane.xlu0 %2078
  %v2080 = vsel %vm1683, %v1949, 0.0
  %2081 = vadd.xlane.f32.xlu0 %v2080
  %v2082 = vpop.xlane.xlu0 %2081
  %v2083 = vsel %vm1683, %v1951, 0.0
  %2084 = vadd.xlane.f32.xlu0 %v2083
  %v2085 = vpop.xlane.xlu0 %2084
  %v2086 = vsel %vm1683, %v1953, 0.0
  %2087 = vadd.xlane.f32.xlu0 %v2086
  %v2088 = vpop.xlane.xlu0 %2087
  %v2089 = vsel %vm1683, %v1955, 0.0
  %2090 = vadd.xlane.f32.xlu0 %v2089
  %v2091 = vpop.xlane.xlu0 %2090
  %v2092 = vsel %vm1683, %v1957, 0.0
  %2093 = vadd.xlane.f32.xlu0 %v2092
  %v2094 = vpop.xlane.xlu0 %2093
  %v2095 = vsel %vm1683, %v1959, 0.0
  %2096 = vadd.xlane.f32.xlu0 %v2095
  %v2097 = vpop.xlane.xlu0 %2096
  %v2098 = vsel %vm1683, %v1961, 0.0
  %2099 = vadd.xlane.f32.xlu0 %v2098
  %v2100 = vpop.xlane.xlu0 %2099
  %v2101 = vsel %vm1683, %v1963, 0.0
  %2102 = vadd.xlane.f32.xlu0 %v2101
  %v2103 = vpop.xlane.xlu0 %2102
  %v2104 = vsel %vm1683, %v1965, 0.0
  %2105 = vadd.xlane.f32.xlu0 %v2104
  %v2106 = vpop.xlane.xlu0 %2105
  %v2107 = vsel %vm1683, %v1967, 0.0
  %2108 = vadd.xlane.f32.xlu0 %v2107
  %v2109 = vpop.xlane.xlu0 %2108
  %v2110 = vsel %vm1683, %v1969, 0.0
  %2111 = vadd.xlane.f32.xlu0 %v2110
  %v2112 = vpop.xlane.xlu0 %2111
  %v2113 = vsel %vm1683, %v1971, 0.0
  %2114 = vadd.xlane.f32.xlu0 %v2113
  %v2115 = vpop.xlane.xlu0 %2114
  %v2116 = vsel %vm1683, %v1973, 0.0
  %2117 = vadd.xlane.f32.xlu0 %v2116
  %v2118 = vpop.xlane.xlu0 %2117
  %v2119 = vsel %vm1683, %v1975, 0.0
  %2120 = vadd.xlane.f32.xlu0 %v2119
  %v2121 = vpop.xlane.xlu0 %2120
  %v2122 = vsel %vm1683, %v1977, 0.0
  %2123 = vadd.xlane.f32.xlu0 %v2122
  %v2124 = vpop.xlane.xlu0 %2123
  %v2125 = vsel %vm1683, %v1979, 0.0
  %2126 = vadd.xlane.f32.xlu0 %v2125
  %v2127 = vpop.xlane.xlu0 %2126
  %v2128 = vsel %vm1683, %v1981, 0.0
  %2129 = vadd.xlane.f32.xlu0 %v2128
  %v2130 = vpop.xlane.xlu0 %2129
  %v2131 = vsel %vm1683, %v1983, 0.0
  %2132 = vadd.xlane.f32.xlu0 %v2131
  %v2133 = vpop.xlane.xlu0 %2132
  %v2134 = vsel %vm1683, %v1985, 0.0
  %2135 = vadd.xlane.f32.xlu0 %v2134
  %v2136 = vpop.xlane.xlu0 %2135
  %v2137 = vsel %vm1683, %v1987, 0.0
  %2138 = vadd.xlane.f32.xlu0 %v2137
  %v2139 = vpop.xlane.xlu0 %2138
  %v2140 = vsel %vm1683, %v1989, 0.0
  %2141 = vadd.xlane.f32.xlu0 %v2140
  %v2142 = vpop.xlane.xlu0 %2141
  %v2143 = vsel %vm1683, %v1991, 0.0
  %2144 = vadd.xlane.f32.xlu0 %v2143
  %v2145 = vpop.xlane.xlu0 %2144
  %v2146 = vsel %vm1683, %v1993, 0.0
  %2147 = vadd.xlane.f32.xlu0 %v2146
  %v2148 = vpop.xlane.xlu0 %2147
  %v2149 = vsel %vm1683, %v1995, 0.0
  %2150 = vadd.xlane.f32.xlu0 %v2149
  %v2151 = vpop.xlane.xlu0 %2150
  %v2152 = vsel %vm1683, %v1997, 0.0
  %2153 = vadd.xlane.f32.xlu0 %v2152
  %v2154 = vpop.xlane.xlu0 %2153
  %v2155 = vsel %vm1683, %v1999, 0.0
  %2156 = vadd.xlane.f32.xlu0 %v2155
  %v2157 = vpop.xlane.xlu0 %2156
  %v2158 = vsel %vm1683, %v2001, 0.0
  %2159 = vadd.xlane.f32.xlu0 %v2158
  %v2160 = vpop.xlane.xlu0 %2159
  %v2161 = vsel %vm1683, %v2003, 0.0
  %2162 = vadd.xlane.f32.xlu0 %v2161
  %v2163 = vpop.xlane.xlu0 %2162
  %v2164 = vsel %vm1683, %v2005, 0.0
  %2165 = vadd.xlane.f32.xlu0 %v2164
  %v2166 = vpop.xlane.xlu0 %2165
  %v2167 = vsel %vm1683, %v2007, 0.0
  %2168 = vadd.xlane.f32.xlu0 %v2167
  %v2169 = vpop.xlane.xlu0 %2168
  %v2170 = vsel %vm1683, %v2009, 0.0
  %2171 = vadd.xlane.f32.xlu0 %v2170
  %v2172 = vpop.xlane.xlu0 %2171
  %v2173 = vsel %vm1683, %v2011, 0.0
  %2174 = vadd.xlane.f32.xlu0 %v2173
  %v2175 = vpop.xlane.xlu0 %2174
  %v2176 = vsel %vm1683, %v2013, 0.0
  %2177 = vadd.xlane.f32.xlu0 %v2176
  %v2178 = vpop.xlane.xlu0 %2177
  %v2179 = vsel %vm1683, %v2015, 0.0
  %2180 = vadd.xlane.f32.xlu0 %v2179
  %v2181 = vpop.xlane.xlu0 %2180
  %v2182 = vsel %vm1683, %v2017, 0.0
  %2183 = vadd.xlane.f32.xlu0 %v2182
  %v2184 = vpop.xlane.xlu0 %2183
  %v2185 = vsel %vm1683, %v2019, 0.0
  %2186 = vadd.xlane.f32.xlu0 %v2185
  %v2187 = vpop.xlane.xlu0 %2186
  %v2188 = vsel %vm1683, %v2021, 0.0
  %2189 = vadd.xlane.f32.xlu0 %v2188
  %v2190 = vpop.xlane.xlu0 %2189
  %v2191 = vsel %vm1683, %v2023, 0.0
  %2192 = vadd.xlane.f32.xlu0 %v2191
  %v2193 = vpop.xlane.xlu0 %2192
  %v2194 = vsel %vm1683, %v2025, 0.0
  %2195 = vadd.xlane.f32.xlu0 %v2194
  %v2196 = vpop.xlane.xlu0 %2195
  %v2197 = vsel %vm1683, %v2027, 0.0
  %2198 = vadd.xlane.f32.xlu0 %v2197
  %v2199 = vpop.xlane.xlu0 %2198
  %v2200 = vsel %vm1683, %v2029, 0.0
  %2201 = vadd.xlane.f32.xlu0 %v2200
  %v2202 = vpop.xlane.xlu0 %2201
  %v2203 = vsel %vm1683, %v2031, 0.0
  %2204 = vadd.xlane.f32.xlu0 %v2203
  %v2205 = vpop.xlane.xlu0 %2204
  %v2206 = vsel %vm1683, %v2033, 0.0
  %2207 = vadd.xlane.f32.xlu0 %v2206
  %v2208 = vpop.xlane.xlu0 %2207
  %v2209 = vsel %vm1683, %v2035, 0.0
  %2210 = vadd.xlane.f32.xlu0 %v2209
  %v2211 = vpop.xlane.xlu0 %2210
  %v2212 = vsel %vm1683, %v2037, 0.0
  %2213 = vadd.xlane.f32.xlu0 %v2212
  %v2214 = vpop.xlane.xlu0 %2213
  %v2215 = vsel %vm1683, %v2039, 0.0
  %2216 = vadd.xlane.f32.xlu0 %v2215
  %v2217 = vpop.xlane.xlu0 %2216
  %v2218 = vsel %vm1683, %v2041, 0.0
  %2219 = vadd.xlane.f32.xlu0 %v2218
  %v2220 = vpop.xlane.xlu0 %2219
  %v2221 = vsel %vm1683, %v2043, 0.0
  %2222 = vadd.xlane.f32.xlu0 %v2221
  %v2223 = vpop.xlane.xlu0 %2222
  %v2224 = vsel %vm1683, %v2045, 0.0
  %2225 = vadd.xlane.f32.xlu0 %v2224
  %v2226 = vpop.xlane.xlu0 %2225
  %v2227 = vsel %vm1683, %v2047, 0.0
  %2228 = vadd.xlane.f32.xlu0 %v2227
  %v2229 = vpop.xlane.xlu0 %2228
  %v2230 = vsel %vm1683, %v2049, 0.0
  %2231 = vadd.xlane.f32.xlu0 %v2230
  %v2232 = vpop.xlane.xlu0 %2231
  %v2233 = vsel %vm1683, %v2051, 0.0
  %2234 = vadd.xlane.f32.xlu0 %v2233
  %v2235 = vpop.xlane.xlu0 %2234
  %v2236 = vsel %vm1683, %v2053, 0.0
  %2237 = vadd.xlane.f32.xlu0 %v2236
  %v2238 = vpop.xlane.xlu0 %2237
  %v2239 = vsel %vm1683, %v2055, 0.0
  %2240 = vadd.xlane.f32.xlu0 %v2239
  %v2241 = vpop.xlane.xlu0 %2240
  %v2242 = vsel %vm1683, %v2057, 0.0
  %2243 = vadd.xlane.f32.xlu0 %v2242
  %v2244 = vpop.xlane.xlu0 %2243
  %v2245 = vsel %vm1683, %v2059, 0.0
  %2246 = vadd.xlane.f32.xlu0 %v2245
  %v2247 = vpop.xlane.xlu0 %2246
  %v2248 = vsel %vm1683, %v2061, 0.0
  %2249 = vadd.xlane.f32.xlu0 %v2248
  %v2250 = vpop.xlane.xlu0 %2249
  %v2251 = vsel %vm1683, %v2063, 0.0
  %2252 = vadd.xlane.f32.xlu0 %v2251
  %v2253 = vpop.xlane.xlu0 %2252
  %v2254 = vsel %vm1683, %v2065, 0.0
  %2255 = vadd.xlane.f32.xlu0 %v2254
  %v2256 = vpop.xlane.xlu0 %2255
  %v2257 = vsel %vm1683, %v2067, 0.0
  %2258 = vadd.xlane.f32.xlu0 %v2257
  %v2259 = vpop.xlane.xlu0 %2258
  %v2260 = vrcp.pop %v2070
  %v2261 = vrcp.pop %v2073
  %v2262 = vrcp.pop %v2076
  %v2263 = vrcp.pop %v2079
  %v2264 = vrcp.pop %v2082
  %v2265 = vrcp.pop %v2085
  %v2266 = vrcp.pop %v2088
  %v2267 = vrcp.pop %v2091
  %v2268 = vrcp.pop %v2094
  %v2269 = vrcp.pop %v2097
  %v2270 = vrcp.pop %v2100
  %v2271 = vrcp.pop %v2103
  %v2272 = vrcp.pop %v2106
  %v2273 = vrcp.pop %v2109
  %v2274 = vrcp.pop %v2112
  %v2275 = vrcp.pop %v2115
  %v2276 = vrcp.pop %v2118
  %v2277 = vrcp.pop %v2121
  %v2278 = vrcp.pop %v2124
  %v2279 = vrcp.pop %v2127
  %v2280 = vrcp.pop %v2130
  %v2281 = vrcp.pop %v2133
  %v2282 = vrcp.pop %v2136
  %v2283 = vrcp.pop %v2139
  %v2284 = vrcp.pop %v2142
  %v2285 = vrcp.pop %v2145
  %v2286 = vrcp.pop %v2148
  %v2287 = vrcp.pop %v2151
  %v2288 = vrcp.pop %v2154
  %v2289 = vrcp.pop %v2157
  %v2290 = vrcp.pop %v2160
  %v2291 = vrcp.pop %v2163
  %v2292 = vrcp.pop %v2166
  %v2293 = vrcp.pop %v2169
  %v2294 = vrcp.pop %v2172
  %v2295 = vrcp.pop %v2175
  %v2296 = vrcp.pop %v2178
  %v2297 = vrcp.pop %v2181
  %v2298 = vrcp.pop %v2184
  %v2299 = vrcp.pop %v2187
  %v2300 = vrcp.pop %v2190
  %v2301 = vrcp.pop %v2193
  %v2302 = vrcp.pop %v2196
  %v2303 = vrcp.pop %v2199
  %v2304 = vrcp.pop %v2202
  %v2305 = vrcp.pop %v2205
  %v2306 = vrcp.pop %v2208
  %v2307 = vrcp.pop %v2211
  %v2308 = vrcp.pop %v2214
  %v2309 = vrcp.pop %v2217
  %v2310 = vrcp.pop %v2220
  %v2311 = vrcp.pop %v2223
  %v2312 = vrcp.pop %v2226
  %v2313 = vrcp.pop %v2229
  %v2314 = vrcp.pop %v2232
  %v2315 = vrcp.pop %v2235
  %v2316 = vrcp.pop %v2238
  %v2317 = vrcp.pop %v2241
  %v2318 = vrcp.pop %v2244
  %v2319 = vrcp.pop %v2247
  %v2320 = vrcp.pop %v2250
  %v2321 = vrcp.pop %v2253
  %v2322 = vrcp.pop %v2256
  %v2323 = vrcp.pop %v2259
  %v2324 = vmul.f32 %v1941, %v2260
  %v2325 = vmul.f32 %v1943, %v2261
  %v2326 = vmul.f32 %v1945, %v2262
  %v2327 = vmul.f32 %v1947, %v2263
  %v2328 = vmul.f32 %v1949, %v2264
  %v2329 = vmul.f32 %v1951, %v2265
  %v2330 = vmul.f32 %v1953, %v2266
  %v2331 = vmul.f32 %v1955, %v2267
  %v2332 = vmul.f32 %v1957, %v2268
  %v2333 = vmul.f32 %v1959, %v2269
  %v2334 = vmul.f32 %v1961, %v2270
  %v2335 = vmul.f32 %v1963, %v2271
  %v2336 = vmul.f32 %v1965, %v2272
  %v2337 = vmul.f32 %v1967, %v2273
  %v2338 = vmul.f32 %v1969, %v2274
  %v2339 = vmul.f32 %v1971, %v2275
  %v2340 = vmul.f32 %v1973, %v2276
  %v2341 = vmul.f32 %v1975, %v2277
  %v2342 = vmul.f32 %v1977, %v2278
  %v2343 = vmul.f32 %v1979, %v2279
  %v2344 = vmul.f32 %v1981, %v2280
  %v2345 = vmul.f32 %v1983, %v2281
  %v2346 = vmul.f32 %v1985, %v2282
  %v2347 = vmul.f32 %v1987, %v2283
  %v2348 = vmul.f32 %v1989, %v2284
  %v2349 = vmul.f32 %v1991, %v2285
  %v2350 = vmul.f32 %v1993, %v2286
  %v2351 = vmul.f32 %v1995, %v2287
  %v2352 = vmul.f32 %v1997, %v2288
  %v2353 = vmul.f32 %v1999, %v2289
  %v2354 = vmul.f32 %v2001, %v2290
  %v2355 = vmul.f32 %v2003, %v2291
  %v2356 = vmul.f32 %v2005, %v2292
  %v2357 = vmul.f32 %v2007, %v2293
  %v2358 = vmul.f32 %v2009, %v2294
  %v2359 = vmul.f32 %v2011, %v2295
  %v2360 = vmul.f32 %v2013, %v2296
  %v2361 = vmul.f32 %v2015, %v2297
  %v2362 = vmul.f32 %v2017, %v2298
  %v2363 = vmul.f32 %v2019, %v2299
  %v2364 = vmul.f32 %v2021, %v2300
  %v2365 = vmul.f32 %v2023, %v2301
  %v2366 = vmul.f32 %v2025, %v2302
  %v2367 = vmul.f32 %v2027, %v2303
  %v2368 = vmul.f32 %v2029, %v2304
  %v2369 = vmul.f32 %v2031, %v2305
  %v2370 = vmul.f32 %v2033, %v2306
  %v2371 = vmul.f32 %v2035, %v2307
  %v2372 = vmul.f32 %v2037, %v2308
  %v2373 = vmul.f32 %v2039, %v2309
  %v2374 = vmul.f32 %v2041, %v2310
  %v2375 = vmul.f32 %v2043, %v2311
  %v2376 = vmul.f32 %v2045, %v2312
  %v2377 = vmul.f32 %v2047, %v2313
  %v2378 = vmul.f32 %v2049, %v2314
  %v2379 = vmul.f32 %v2051, %v2315
  %v2380 = vmul.f32 %v2053, %v2316
  %v2381 = vmul.f32 %v2055, %v2317
  %v2382 = vmul.f32 %v2057, %v2318
  %v2383 = vmul.f32 %v2059, %v2319
  %v2384 = vmul.f32 %v2061, %v2320
  %v2385 = vmul.f32 %v2063, %v2321
  %v2386 = vmul.f32 %v2065, %v2322
  %v2387 = vmul.f32 %v2067, %v2323
  %v2389 = vsel %vm1683, %v246, 0
  %v2392 = vsel %vm1683, %v2324, 0
  %v2395 = vsel %vm1683, %v2325, 0
  %v2398 = vsel %vm1683, %v2326, 0
  %v2401 = vsel %vm1683, %v2327, 0
  %v2404 = vsel %vm1683, %v2328, 0
  %v2407 = vsel %vm1683, %v2329, 0
  %v2410 = vsel %vm1683, %v2330, 0
  %v2413 = vsel %vm1683, %v2331, 0
  %2415 = vmatprep.subr.mxu0 0.0
  %2416 = vmatpush1.xpose.msra.mxu0 %v2392
  %2417 = vmatprep.subr.mxu0 0.0
  %2418 = vmatpush1.xpose.msra.mxu0 %v2395
  %2419 = vmatprep.subr.mxu0 0.0
  %2420 = vmatpush1.xpose.msra.mxu0 %v2398
  %2421 = vmatprep.subr.mxu0 0.0
  %2422 = vmatpush1.xpose.msra.mxu0 %v2401
  %2423 = vmatprep.subr.mxu0 0.0
  %2424 = vmatpush1.xpose.msra.mxu0 %v2404
  %2425 = vmatprep.subr.mxu0 0.0
  %2426 = vmatpush1.xpose.msra.mxu0 %v2407
  %2427 = vmatprep.subr.mxu0 0.0
  %2428 = vmatpush1.xpose.msra.mxu0 %v2410
  %2429 = vmatprep.subr.mxu0 0.0
  %2430 = vmatpush1.xpose.msra.mxu0 %v2413
  %2431 = vmatprep.subr.mxu0 0.0
  %2432 = vmatpush1.xpose.msra.mxu0 0.0
  %2433 = vmatprep.subr.mxu0 0.0
  %2434 = vmatpush1.xpose.msra.mxu0 0.0
  %2435 = vmatprep.subr.mxu0 0.0
  %2436 = vmatpush1.xpose.msra.mxu0 0.0
  %2437 = vmatprep.subr.mxu0 0.0
  %2438 = vmatpush1.xpose.msra.mxu0 0.0
  %2439 = vmatprep.subr.mxu0 0.0
  %2440 = vmatpush1.xpose.msra.mxu0 0.0
  %2441 = vmatprep.subr.mxu0 0.0
  %2442 = vmatpush1.xpose.msra.mxu0 0.0
  %2443 = vmatprep.subr.mxu0 0.0
  %2444 = vmatpush1.xpose.msra.mxu0 0.0
  %2445 = vmatprep.subr.mxu0 0.0
  %2446 = vmatpush1.xpose.msra.mxu0 0.0
  %2447 = vmatprep.subr.mxu0 0.0
  %2448 = vmatpush1.xpose.msra.mxu0 0.0
  %2449 = vmatprep.subr.mxu0 0.0
  %2450 = vmatpush1.xpose.msra.mxu0 0.0
  %2451 = vmatprep.subr.mxu0 0.0
  %2452 = vmatpush1.xpose.msra.mxu0 0.0
  %2453 = vmatprep.subr.mxu0 0.0
  %2454 = vmatpush1.xpose.msra.mxu0 0.0
  %2455 = vmatprep.subr.mxu0 0.0
  %2456 = vmatpush1.xpose.msra.mxu0 0.0
  %2457 = vmatprep.subr.mxu0 0.0
  %2458 = vmatpush1.xpose.msra.mxu0 0.0
  %2459 = vmatprep.subr.mxu0 0.0
  %2460 = vmatpush1.xpose.msra.mxu0 0.0
  %2461 = vmatprep.subr.mxu0 0.0
  %2462 = vmatpush1.xpose.msra.mxu0 0.0
  %2463 = vmatprep.subr.mxu0 0.0
  %2464 = vmatpush1.xpose.msra.mxu0 0.0
  %2465 = vmatprep.subr.mxu0 0.0
  %2466 = vmatpush1.xpose.msra.mxu0 0.0
  %2467 = vmatprep.subr.mxu0 0.0
  %2468 = vmatpush1.xpose.msra.mxu0 0.0
  %2469 = vmatprep.subr.mxu0 0.0
  %2470 = vmatpush1.xpose.msra.mxu0 0.0
  %2471 = vmatprep.subr.mxu0 0.0
  %2472 = vmatpush1.xpose.msra.mxu0 0.0
  %2473 = vmatprep.subr.mxu0 0.0
  %2474 = vmatpush1.xpose.msra.mxu0 0.0
  %2475 = vmatprep.subr.mxu0 0.0
  %2476 = vmatpush1.xpose.msra.mxu0 0.0
  %2477 = vmatprep.subr.mxu0 0.0
  %2478 = vmatpush1.xpose.msra.mxu0 0.0
  %2479 = vmatprep.mubr.f32.mxu0 0.0
  %2480 = vmatmul.mubr.f32.gmra.mrb[0].mxu0 %v2389
  %v2481 = vpop.f32.mrb[0].mxu0
  %v2482 = vadd.f32 0.0, %v2481
  %v2483 = vpop.f32.mrb[0].mxu0
  %2484 = vdwg.mxu0
  %v2486 = vsel %vm1683, %v251, 0
  %v2489 = vsel %vm1683, %v2332, 0
  %v2492 = vsel %vm1683, %v2333, 0
  %v2495 = vsel %vm1683, %v2334, 0
  %v2498 = vsel %vm1683, %v2335, 0
  %v2501 = vsel %vm1683, %v2336, 0
  %v2504 = vsel %vm1683, %v2337, 0
  %v2507 = vsel %vm1683, %v2338, 0
  %v2510 = vsel %vm1683, %v2339, 0
  %2512 = vmatprep.subr.mxu0 0.0
  %2513 = vmatpush1.xpose.msra.mxu0 %v2489
  %2514 = vmatprep.subr.mxu0 0.0
  %2515 = vmatpush1.xpose.msra.mxu0 %v2492
  %2516 = vmatprep.subr.mxu0 0.0
  %2517 = vmatpush1.xpose.msra.mxu0 %v2495
  %2518 = vmatprep.subr.mxu0 0.0
  %2519 = vmatpush1.xpose.msra.mxu0 %v2498
  %2520 = vmatprep.subr.mxu0 0.0
  %2521 = vmatpush1.xpose.msra.mxu0 %v2501
  %2522 = vmatprep.subr.mxu0 0.0
  %2523 = vmatpush1.xpose.msra.mxu0 %v2504
  %2524 = vmatprep.subr.mxu0 0.0
  %2525 = vmatpush1.xpose.msra.mxu0 %v2507
  %2526 = vmatprep.subr.mxu0 0.0
  %2527 = vmatpush1.xpose.msra.mxu0 %v2510
  %2528 = vmatprep.subr.mxu0 0.0
  %2529 = vmatpush1.xpose.msra.mxu0 0.0
  %2530 = vmatprep.subr.mxu0 0.0
  %2531 = vmatpush1.xpose.msra.mxu0 0.0
  %2532 = vmatprep.subr.mxu0 0.0
  %2533 = vmatpush1.xpose.msra.mxu0 0.0
  %2534 = vmatprep.subr.mxu0 0.0
  %2535 = vmatpush1.xpose.msra.mxu0 0.0
  %2536 = vmatprep.subr.mxu0 0.0
  %2537 = vmatpush1.xpose.msra.mxu0 0.0
  %2538 = vmatprep.subr.mxu0 0.0
  %2539 = vmatpush1.xpose.msra.mxu0 0.0
  %2540 = vmatprep.subr.mxu0 0.0
  %2541 = vmatpush1.xpose.msra.mxu0 0.0
  %2542 = vmatprep.subr.mxu0 0.0
  %2543 = vmatpush1.xpose.msra.mxu0 0.0
  %2544 = vmatprep.subr.mxu0 0.0
  %2545 = vmatpush1.xpose.msra.mxu0 0.0
  %2546 = vmatprep.subr.mxu0 0.0
  %2547 = vmatpush1.xpose.msra.mxu0 0.0
  %2548 = vmatprep.subr.mxu0 0.0
  %2549 = vmatpush1.xpose.msra.mxu0 0.0
  %2550 = vmatprep.subr.mxu0 0.0
  %2551 = vmatpush1.xpose.msra.mxu0 0.0
  %2552 = vmatprep.subr.mxu0 0.0
  %2553 = vmatpush1.xpose.msra.mxu0 0.0
  %2554 = vmatprep.subr.mxu0 0.0
  %2555 = vmatpush1.xpose.msra.mxu0 0.0
  %2556 = vmatprep.subr.mxu0 0.0
  %2557 = vmatpush1.xpose.msra.mxu0 0.0
  %2558 = vmatprep.subr.mxu0 0.0
  %2559 = vmatpush1.xpose.msra.mxu0 0.0
  %2560 = vmatprep.subr.mxu0 0.0
  %2561 = vmatpush1.xpose.msra.mxu0 0.0
  %2562 = vmatprep.subr.mxu0 0.0
  %2563 = vmatpush1.xpose.msra.mxu0 0.0
  %2564 = vmatprep.subr.mxu0 0.0
  %2565 = vmatpush1.xpose.msra.mxu0 0.0
  %2566 = vmatprep.subr.mxu0 0.0
  %2567 = vmatpush1.xpose.msra.mxu0 0.0
  %2568 = vmatprep.subr.mxu0 0.0
  %2569 = vmatpush1.xpose.msra.mxu0 0.0
  %2570 = vmatprep.subr.mxu0 0.0
  %2571 = vmatpush1.xpose.msra.mxu0 0.0
  %2572 = vmatprep.subr.mxu0 0.0
  %2573 = vmatpush1.xpose.msra.mxu0 0.0
  %2574 = vmatprep.subr.mxu0 0.0
  %2575 = vmatpush1.xpose.msra.mxu0 0.0
  %2576 = vmatprep.mubr.f32.mxu0 0.0
  %2577 = vmatmul.mubr.f32.gmra.mrb[0].mxu0 %v2486
  %v2578 = vpop.f32.mrb[0].mxu0
  %v2579 = vadd.f32 0.0, %v2578
  %v2580 = vpop.f32.mrb[0].mxu0
  %2581 = vdwg.mxu0
  %v2583 = vsel %vm1683, %v256, 0
  %v2586 = vsel %vm1683, %v2340, 0
  %v2589 = vsel %vm1683, %v2341, 0
  %v2592 = vsel %vm1683, %v2342, 0
  %v2595 = vsel %vm1683, %v2343, 0
  %v2598 = vsel %vm1683, %v2344, 0
  %v2601 = vsel %vm1683, %v2345, 0
  %v2604 = vsel %vm1683, %v2346, 0
  %v2607 = vsel %vm1683, %v2347, 0
  %2609 = vmatprep.subr.mxu0 0.0
  %2610 = vmatpush1.xpose.msra.mxu0 %v2586
  %2611 = vmatprep.subr.mxu0 0.0
  %2612 = vmatpush1.xpose.msra.mxu0 %v2589
  %2613 = vmatprep.subr.mxu0 0.0
  %2614 = vmatpush1.xpose.msra.mxu0 %v2592
  %2615 = vmatprep.subr.mxu0 0.0
  %2616 = vmatpush1.xpose.msra.mxu0 %v2595
  %2617 = vmatprep.subr.mxu0 0.0
  %2618 = vmatpush1.xpose.msra.mxu0 %v2598
  %2619 = vmatprep.subr.mxu0 0.0
  %2620 = vmatpush1.xpose.msra.mxu0 %v2601
  %2621 = vmatprep.subr.mxu0 0.0
  %2622 = vmatpush1.xpose.msra.mxu0 %v2604
  %2623 = vmatprep.subr.mxu0 0.0
  %2624 = vmatpush1.xpose.msra.mxu0 %v2607
  %2625 = vmatprep.subr.mxu0 0.0
  %2626 = vmatpush1.xpose.msra.mxu0 0.0
  %2627 = vmatprep.subr.mxu0 0.0
  %2628 = vmatpush1.xpose.msra.mxu0 0.0
  %2629 = vmatprep.subr.mxu0 0.0
  %2630 = vmatpush1.xpose.msra.mxu0 0.0
  %2631 = vmatprep.subr.mxu0 0.0
  %2632 = vmatpush1.xpose.msra.mxu0 0.0
  %2633 = vmatprep.subr.mxu0 0.0
  %2634 = vmatpush1.xpose.msra.mxu0 0.0
  %2635 = vmatprep.subr.mxu0 0.0
  %2636 = vmatpush1.xpose.msra.mxu0 0.0
  %2637 = vmatprep.subr.mxu0 0.0
  %2638 = vmatpush1.xpose.msra.mxu0 0.0
  %2639 = vmatprep.subr.mxu0 0.0
  %2640 = vmatpush1.xpose.msra.mxu0 0.0
  %2641 = vmatprep.subr.mxu0 0.0
  %2642 = vmatpush1.xpose.msra.mxu0 0.0
  %2643 = vmatprep.subr.mxu0 0.0
  %2644 = vmatpush1.xpose.msra.mxu0 0.0
  %2645 = vmatprep.subr.mxu0 0.0
  %2646 = vmatpush1.xpose.msra.mxu0 0.0
  %2647 = vmatprep.subr.mxu0 0.0
  %2648 = vmatpush1.xpose.msra.mxu0 0.0
  %2649 = vmatprep.subr.mxu0 0.0
  %2650 = vmatpush1.xpose.msra.mxu0 0.0
  %2651 = vmatprep.subr.mxu0 0.0
  %2652 = vmatpush1.xpose.msra.mxu0 0.0
  %2653 = vmatprep.subr.mxu0 0.0
  %2654 = vmatpush1.xpose.msra.mxu0 0.0
  %2655 = vmatprep.subr.mxu0 0.0
  %2656 = vmatpush1.xpose.msra.mxu0 0.0
  %2657 = vmatprep.subr.mxu0 0.0
  %2658 = vmatpush1.xpose.msra.mxu0 0.0
  %2659 = vmatprep.subr.mxu0 0.0
  %2660 = vmatpush1.xpose.msra.mxu0 0.0
  %2661 = vmatprep.subr.mxu0 0.0
  %2662 = vmatpush1.xpose.msra.mxu0 0.0
  %2663 = vmatprep.subr.mxu0 0.0
  %2664 = vmatpush1.xpose.msra.mxu0 0.0
  %2665 = vmatprep.subr.mxu0 0.0
  %2666 = vmatpush1.xpose.msra.mxu0 0.0
  %2667 = vmatprep.subr.mxu0 0.0
  %2668 = vmatpush1.xpose.msra.mxu0 0.0
  %2669 = vmatprep.subr.mxu0 0.0
  %2670 = vmatpush1.xpose.msra.mxu0 0.0
  %2671 = vmatprep.subr.mxu0 0.0
  %2672 = vmatpush1.xpose.msra.mxu0 0.0
  %2673 = vmatprep.mubr.f32.mxu0 0.0
  %2674 = vmatmul.mubr.f32.gmra.mrb[0].mxu0 %v2583
  %v2675 = vpop.f32.mrb[0].mxu0
  %v2676 = vadd.f32 0.0, %v2675
  %v2677 = vpop.f32.mrb[0].mxu0
  %2678 = vdwg.mxu0
  %v2680 = vsel %vm1683, %v261, 0
  %v2683 = vsel %vm1683, %v2348, 0
  %v2686 = vsel %vm1683, %v2349, 0
  %v2689 = vsel %vm1683, %v2350, 0
  %v2692 = vsel %vm1683, %v2351, 0
  %v2695 = vsel %vm1683, %v2352, 0
  %v2698 = vsel %vm1683, %v2353, 0
  %v2701 = vsel %vm1683, %v2354, 0
  %v2704 = vsel %vm1683, %v2355, 0
  %2706 = vmatprep.subr.mxu0 0.0
  %2707 = vmatpush1.xpose.msra.mxu0 %v2683
  %2708 = vmatprep.subr.mxu0 0.0
  %2709 = vmatpush1.xpose.msra.mxu0 %v2686
  %2710 = vmatprep.subr.mxu0 0.0
  %2711 = vmatpush1.xpose.msra.mxu0 %v2689
  %2712 = vmatprep.subr.mxu0 0.0
  %2713 = vmatpush1.xpose.msra.mxu0 %v2692
  %2714 = vmatprep.subr.mxu0 0.0
  %2715 = vmatpush1.xpose.msra.mxu0 %v2695
  %2716 = vmatprep.subr.mxu0 0.0
  %2717 = vmatpush1.xpose.msra.mxu0 %v2698
  %2718 = vmatprep.subr.mxu0 0.0
  %2719 = vmatpush1.xpose.msra.mxu0 %v2701
  %2720 = vmatprep.subr.mxu0 0.0
  %2721 = vmatpush1.xpose.msra.mxu0 %v2704
  %2722 = vmatprep.subr.mxu0 0.0
  %2723 = vmatpush1.xpose.msra.mxu0 0.0
  %2724 = vmatprep.subr.mxu0 0.0
  %2725 = vmatpush1.xpose.msra.mxu0 0.0
  %2726 = vmatprep.subr.mxu0 0.0
  %2727 = vmatpush1.xpose.msra.mxu0 0.0
  %2728 = vmatprep.subr.mxu0 0.0
  %2729 = vmatpush1.xpose.msra.mxu0 0.0
  %2730 = vmatprep.subr.mxu0 0.0
  %2731 = vmatpush1.xpose.msra.mxu0 0.0
  %2732 = vmatprep.subr.mxu0 0.0
  %2733 = vmatpush1.xpose.msra.mxu0 0.0
  %2734 = vmatprep.subr.mxu0 0.0
  %2735 = vmatpush1.xpose.msra.mxu0 0.0
  %2736 = vmatprep.subr.mxu0 0.0
  %2737 = vmatpush1.xpose.msra.mxu0 0.0
  %2738 = vmatprep.subr.mxu0 0.0
  %2739 = vmatpush1.xpose.msra.mxu0 0.0
  %2740 = vmatprep.subr.mxu0 0.0
  %2741 = vmatpush1.xpose.msra.mxu0 0.0
  %2742 = vmatprep.subr.mxu0 0.0
  %2743 = vmatpush1.xpose.msra.mxu0 0.0
  %2744 = vmatprep.subr.mxu0 0.0
  %2745 = vmatpush1.xpose.msra.mxu0 0.0
  %2746 = vmatprep.subr.mxu0 0.0
  %2747 = vmatpush1.xpose.msra.mxu0 0.0
  %2748 = vmatprep.subr.mxu0 0.0
  %2749 = vmatpush1.xpose.msra.mxu0 0.0
  %2750 = vmatprep.subr.mxu0 0.0
  %2751 = vmatpush1.xpose.msra.mxu0 0.0
  %2752 = vmatprep.subr.mxu0 0.0
  %2753 = vmatpush1.xpose.msra.mxu0 0.0
  %2754 = vmatprep.subr.mxu0 0.0
  %2755 = vmatpush1.xpose.msra.mxu0 0.0
  %2756 = vmatprep.subr.mxu0 0.0
  %2757 = vmatpush1.xpose.msra.mxu0 0.0
  %2758 = vmatprep.subr.mxu0 0.0
  %2759 = vmatpush1.xpose.msra.mxu0 0.0
  %2760 = vmatprep.subr.mxu0 0.0
  %2761 = vmatpush1.xpose.msra.mxu0 0.0
  %2762 = vmatprep.subr.mxu0 0.0
  %2763 = vmatpush1.xpose.msra.mxu0 0.0
  %2764 = vmatprep.subr.mxu0 0.0
  %2765 = vmatpush1.xpose.msra.mxu0 0.0
  %2766 = vmatprep.subr.mxu0 0.0
  %2767 = vmatpush1.xpose.msra.mxu0 0.0
  %2768 = vmatprep.subr.mxu0 0.0
  %2769 = vmatpush1.xpose.msra.mxu0 0.0
  %2770 = vmatprep.mubr.f32.mxu0 0.0
  %2771 = vmatmul.mubr.f32.gmra.mrb[0].mxu0 %v2680
  %v2772 = vpop.f32.mrb[0].mxu0
  %v2773 = vadd.f32 0.0, %v2772
  %v2774 = vpop.f32.mrb[0].mxu0
  %2775 = vdwg.mxu0
  %v2777 = vsel %vm1683, %v376, 0
  %v2780 = vsel %vm1683, %v2356, 0
  %v2783 = vsel %vm1683, %v2357, 0
  %v2786 = vsel %vm1683, %v2358, 0
  %v2789 = vsel %vm1683, %v2359, 0
  %v2792 = vsel %vm1683, %v2360, 0
  %v2795 = vsel %vm1683, %v2361, 0
  %v2798 = vsel %vm1683, %v2362, 0
  %v2801 = vsel %vm1683, %v2363, 0
  %2803 = vmatprep.subr.mxu0 0.0
  %2804 = vmatpush1.xpose.msra.mxu0 %v2780
  %2805 = vmatprep.subr.mxu0 0.0
  %2806 = vmatpush1.xpose.msra.mxu0 %v2783
  %2807 = vmatprep.subr.mxu0 0.0
  %2808 = vmatpush1.xpose.msra.mxu0 %v2786
  %2809 = vmatprep.subr.mxu0 0.0
  %2810 = vmatpush1.xpose.msra.mxu0 %v2789
  %2811 = vmatprep.subr.mxu0 0.0
  %2812 = vmatpush1.xpose.msra.mxu0 %v2792
  %2813 = vmatprep.subr.mxu0 0.0
  %2814 = vmatpush1.xpose.msra.mxu0 %v2795
  %2815 = vmatprep.subr.mxu0 0.0
  %2816 = vmatpush1.xpose.msra.mxu0 %v2798
  %2817 = vmatprep.subr.mxu0 0.0
  %2818 = vmatpush1.xpose.msra.mxu0 %v2801
  %2819 = vmatprep.subr.mxu0 0.0
  %2820 = vmatpush1.xpose.msra.mxu0 0.0
  %2821 = vmatprep.subr.mxu0 0.0
  %2822 = vmatpush1.xpose.msra.mxu0 0.0
  %2823 = vmatprep.subr.mxu0 0.0
  %2824 = vmatpush1.xpose.msra.mxu0 0.0
  %2825 = vmatprep.subr.mxu0 0.0
  %2826 = vmatpush1.xpose.msra.mxu0 0.0
  %2827 = vmatprep.subr.mxu0 0.0
  %2828 = vmatpush1.xpose.msra.mxu0 0.0
  %2829 = vmatprep.subr.mxu0 0.0
  %2830 = vmatpush1.xpose.msra.mxu0 0.0
  %2831 = vmatprep.subr.mxu0 0.0
  %2832 = vmatpush1.xpose.msra.mxu0 0.0
  %2833 = vmatprep.subr.mxu0 0.0
  %2834 = vmatpush1.xpose.msra.mxu0 0.0
  %2835 = vmatprep.subr.mxu0 0.0
  %2836 = vmatpush1.xpose.msra.mxu0 0.0
  %2837 = vmatprep.subr.mxu0 0.0
  %2838 = vmatpush1.xpose.msra.mxu0 0.0
  %2839 = vmatprep.subr.mxu0 0.0
  %2840 = vmatpush1.xpose.msra.mxu0 0.0
  %2841 = vmatprep.subr.mxu0 0.0
  %2842 = vmatpush1.xpose.msra.mxu0 0.0
  %2843 = vmatprep.subr.mxu0 0.0
  %2844 = vmatpush1.xpose.msra.mxu0 0.0
  %2845 = vmatprep.subr.mxu0 0.0
  %2846 = vmatpush1.xpose.msra.mxu0 0.0
  %2847 = vmatprep.subr.mxu0 0.0
  %2848 = vmatpush1.xpose.msra.mxu0 0.0
  %2849 = vmatprep.subr.mxu0 0.0
  %2850 = vmatpush1.xpose.msra.mxu0 0.0
  %2851 = vmatprep.subr.mxu0 0.0
  %2852 = vmatpush1.xpose.msra.mxu0 0.0
  %2853 = vmatprep.subr.mxu0 0.0
  %2854 = vmatpush1.xpose.msra.mxu0 0.0
  %2855 = vmatprep.subr.mxu0 0.0
  %2856 = vmatpush1.xpose.msra.mxu0 0.0
  %2857 = vmatprep.subr.mxu0 0.0
  %2858 = vmatpush1.xpose.msra.mxu0 0.0
  %2859 = vmatprep.subr.mxu0 0.0
  %2860 = vmatpush1.xpose.msra.mxu0 0.0
  %2861 = vmatprep.subr.mxu0 0.0
  %2862 = vmatpush1.xpose.msra.mxu0 0.0
  %2863 = vmatprep.subr.mxu0 0.0
  %2864 = vmatpush1.xpose.msra.mxu0 0.0
  %2865 = vmatprep.subr.mxu0 0.0
  %2866 = vmatpush1.xpose.msra.mxu0 0.0
  %2867 = vmatprep.mubr.f32.mxu0 0.0
  %2868 = vmatmul.mubr.f32.gmra.mrb[0].mxu0 %v2777
  %v2869 = vpop.f32.mrb[0].mxu0
  %v2870 = vadd.f32 0.0, %v2869
  %v2871 = vpop.f32.mrb[0].mxu0
  %2872 = vdwg.mxu0
  %v2874 = vsel %vm1683, %v381, 0
  %v2877 = vsel %vm1683, %v2364, 0
  %v2880 = vsel %vm1683, %v2365, 0
  %v2883 = vsel %vm1683, %v2366, 0
  %v2886 = vsel %vm1683, %v2367, 0
  %v2889 = vsel %vm1683, %v2368, 0
  %v2892 = vsel %vm1683, %v2369, 0
  %v2895 = vsel %vm1683, %v2370, 0
  %v2898 = vsel %vm1683, %v2371, 0
  %2900 = vmatprep.subr.mxu0 0.0
  %2901 = vmatpush1.xpose.msra.mxu0 %v2877
  %2902 = vmatprep.subr.mxu0 0.0
  %2903 = vmatpush1.xpose.msra.mxu0 %v2880
  %2904 = vmatprep.subr.mxu0 0.0
  %2905 = vmatpush1.xpose.msra.mxu0 %v2883
  %2906 = vmatprep.subr.mxu0 0.0
  %2907 = vmatpush1.xpose.msra.mxu0 %v2886
  %2908 = vmatprep.subr.mxu0 0.0
  %2909 = vmatpush1.xpose.msra.mxu0 %v2889
  %2910 = vmatprep.subr.mxu0 0.0
  %2911 = vmatpush1.xpose.msra.mxu0 %v2892
  %2912 = vmatprep.subr.mxu0 0.0
  %2913 = vmatpush1.xpose.msra.mxu0 %v2895
  %2914 = vmatprep.subr.mxu0 0.0
  %2915 = vmatpush1.xpose.msra.mxu0 %v2898
  %2916 = vmatprep.subr.mxu0 0.0
  %2917 = vmatpush1.xpose.msra.mxu0 0.0
  %2918 = vmatprep.subr.mxu0 0.0
  %2919 = vmatpush1.xpose.msra.mxu0 0.0
  %2920 = vmatprep.subr.mxu0 0.0
  %2921 = vmatpush1.xpose.msra.mxu0 0.0
  %2922 = vmatprep.subr.mxu0 0.0
  %2923 = vmatpush1.xpose.msra.mxu0 0.0
  %2924 = vmatprep.subr.mxu0 0.0
  %2925 = vmatpush1.xpose.msra.mxu0 0.0
  %2926 = vmatprep.subr.mxu0 0.0
  %2927 = vmatpush1.xpose.msra.mxu0 0.0
  %2928 = vmatprep.subr.mxu0 0.0
  %2929 = vmatpush1.xpose.msra.mxu0 0.0
  %2930 = vmatprep.subr.mxu0 0.0
  %2931 = vmatpush1.xpose.msra.mxu0 0.0
  %2932 = vmatprep.subr.mxu0 0.0
  %2933 = vmatpush1.xpose.msra.mxu0 0.0
  %2934 = vmatprep.subr.mxu0 0.0
  %2935 = vmatpush1.xpose.msra.mxu0 0.0
  %2936 = vmatprep.subr.mxu0 0.0
  %2937 = vmatpush1.xpose.msra.mxu0 0.0
  %2938 = vmatprep.subr.mxu0 0.0
  %2939 = vmatpush1.xpose.msra.mxu0 0.0
  %2940 = vmatprep.subr.mxu0 0.0
  %2941 = vmatpush1.xpose.msra.mxu0 0.0
  %2942 = vmatprep.subr.mxu0 0.0
  %2943 = vmatpush1.xpose.msra.mxu0 0.0
  %2944 = vmatprep.subr.mxu0 0.0
  %2945 = vmatpush1.xpose.msra.mxu0 0.0
  %2946 = vmatprep.subr.mxu0 0.0
  %2947 = vmatpush1.xpose.msra.mxu0 0.0
  %2948 = vmatprep.subr.mxu0 0.0
  %2949 = vmatpush1.xpose.msra.mxu0 0.0
  %2950 = vmatprep.subr.mxu0 0.0
  %2951 = vmatpush1.xpose.msra.mxu0 0.0
  %2952 = vmatprep.subr.mxu0 0.0
  %2953 = vmatpush1.xpose.msra.mxu0 0.0
  %2954 = vmatprep.subr.mxu0 0.0
  %2955 = vmatpush1.xpose.msra.mxu0 0.0
  %2956 = vmatprep.subr.mxu0 0.0
  %2957 = vmatpush1.xpose.msra.mxu0 0.0
  %2958 = vmatprep.subr.mxu0 0.0
  %2959 = vmatpush1.xpose.msra.mxu0 0.0
  %2960 = vmatprep.subr.mxu0 0.0
  %2961 = vmatpush1.xpose.msra.mxu0 0.0
  %2962 = vmatprep.subr.mxu0 0.0
  %2963 = vmatpush1.xpose.msra.mxu0 0.0
  %2964 = vmatprep.mubr.f32.mxu0 0.0
  %2965 = vmatmul.mubr.f32.gmra.mrb[0].mxu0 %v2874
  %v2966 = vpop.f32.mrb[0].mxu0
  %v2967 = vadd.f32 0.0, %v2966
  %v2968 = vpop.f32.mrb[0].mxu0
  %2969 = vdwg.mxu0
  %v2971 = vsel %vm1683, %v386, 0
  %v2974 = vsel %vm1683, %v2372, 0
  %v2977 = vsel %vm1683, %v2373, 0
  %v2980 = vsel %vm1683, %v2374, 0
  %v2983 = vsel %vm1683, %v2375, 0
  %v2986 = vsel %vm1683, %v2376, 0
  %v2989 = vsel %vm1683, %v2377, 0
  %v2992 = vsel %vm1683, %v2378, 0
  %v2995 = vsel %vm1683, %v2379, 0
  %2997 = vmatprep.subr.mxu0 0.0
  %2998 = vmatpush1.xpose.msra.mxu0 %v2974
  %2999 = vmatprep.subr.mxu0 0.0
  %3000 = vmatpush1.xpose.msra.mxu0 %v2977
  %3001 = vmatprep.subr.mxu0 0.0
  %3002 = vmatpush1.xpose.msra.mxu0 %v2980
  %3003 = vmatprep.subr.mxu0 0.0
  %3004 = vmatpush1.xpose.msra.mxu0 %v2983
  %3005 = vmatprep.subr.mxu0 0.0
  %3006 = vmatpush1.xpose.msra.mxu0 %v2986
  %3007 = vmatprep.subr.mxu0 0.0
  %3008 = vmatpush1.xpose.msra.mxu0 %v2989
  %3009 = vmatprep.subr.mxu0 0.0
  %3010 = vmatpush1.xpose.msra.mxu0 %v2992
  %3011 = vmatprep.subr.mxu0 0.0
  %3012 = vmatpush1.xpose.msra.mxu0 %v2995
  %3013 = vmatprep.subr.mxu0 0.0
  %3014 = vmatpush1.xpose.msra.mxu0 0.0
  %3015 = vmatprep.subr.mxu0 0.0
  %3016 = vmatpush1.xpose.msra.mxu0 0.0
  %3017 = vmatprep.subr.mxu0 0.0
  %3018 = vmatpush1.xpose.msra.mxu0 0.0
  %3019 = vmatprep.subr.mxu0 0.0
  %3020 = vmatpush1.xpose.msra.mxu0 0.0
  %3021 = vmatprep.subr.mxu0 0.0
  %3022 = vmatpush1.xpose.msra.mxu0 0.0
  %3023 = vmatprep.subr.mxu0 0.0
  %3024 = vmatpush1.xpose.msra.mxu0 0.0
  %3025 = vmatprep.subr.mxu0 0.0
  %3026 = vmatpush1.xpose.msra.mxu0 0.0
  %3027 = vmatprep.subr.mxu0 0.0
  %3028 = vmatpush1.xpose.msra.mxu0 0.0
  %3029 = vmatprep.subr.mxu0 0.0
  %3030 = vmatpush1.xpose.msra.mxu0 0.0
  %3031 = vmatprep.subr.mxu0 0.0
  %3032 = vmatpush1.xpose.msra.mxu0 0.0
  %3033 = vmatprep.subr.mxu0 0.0
  %3034 = vmatpush1.xpose.msra.mxu0 0.0
  %3035 = vmatprep.subr.mxu0 0.0
  %3036 = vmatpush1.xpose.msra.mxu0 0.0
  %3037 = vmatprep.subr.mxu0 0.0
  %3038 = vmatpush1.xpose.msra.mxu0 0.0
  %3039 = vmatprep.subr.mxu0 0.0
  %3040 = vmatpush1.xpose.msra.mxu0 0.0
  %3041 = vmatprep.subr.mxu0 0.0
  %3042 = vmatpush1.xpose.msra.mxu0 0.0
  %3043 = vmatprep.subr.mxu0 0.0
  %3044 = vmatpush1.xpose.msra.mxu0 0.0
  %3045 = vmatprep.subr.mxu0 0.0
  %3046 = vmatpush1.xpose.msra.mxu0 0.0
  %3047 = vmatprep.subr.mxu0 0.0
  %3048 = vmatpush1.xpose.msra.mxu0 0.0
  %3049 = vmatprep.subr.mxu0 0.0
  %3050 = vmatpush1.xpose.msra.mxu0 0.0
  %3051 = vmatprep.subr.mxu0 0.0
  %3052 = vmatpush1.xpose.msra.mxu0 0.0
  %3053 = vmatprep.subr.mxu0 0.0
  %3054 = vmatpush1.xpose.msra.mxu0 0.0
  %3055 = vmatprep.subr.mxu0 0.0
  %3056 = vmatpush1.xpose.msra.mxu0 0.0
  %3057 = vmatprep.subr.mxu0 0.0
  %3058 = vmatpush1.xpose.msra.mxu0 0.0
  %3059 = vmatprep.subr.mxu0 0.0
  %3060 = vmatpush1.xpose.msra.mxu0 0.0
  %3061 = vmatprep.mubr.f32.mxu0 0.0
  %3062 = vmatmul.mubr.f32.gmra.mrb[0].mxu0 %v2971
  %v3063 = vpop.f32.mrb[0].mxu0
  %v3064 = vadd.f32 0.0, %v3063
  %v3065 = vpop.f32.mrb[0].mxu0
  %3066 = vdwg.mxu0
  %v3068 = vsel %vm1683, %v391, 0
  %v3071 = vsel %vm1683, %v2380, 0
  %v3074 = vsel %vm1683, %v2381, 0
  %v3077 = vsel %vm1683, %v2382, 0
  %v3080 = vsel %vm1683, %v2383, 0
  %v3083 = vsel %vm1683, %v2384, 0
  %v3086 = vsel %vm1683, %v2385, 0
  %v3089 = vsel %vm1683, %v2386, 0
  %v3092 = vsel %vm1683, %v2387, 0
  %3094 = vmatprep.subr.mxu0 0.0
  %3095 = vmatpush1.xpose.msra.mxu0 %v3071
  %3096 = vmatprep.subr.mxu0 0.0
  %3097 = vmatpush1.xpose.msra.mxu0 %v3074
  %3098 = vmatprep.subr.mxu0 0.0
  %3099 = vmatpush1.xpose.msra.mxu0 %v3077
  %3100 = vmatprep.subr.mxu0 0.0
  %3101 = vmatpush1.xpose.msra.mxu0 %v3080
  %3102 = vmatprep.subr.mxu0 0.0
  %3103 = vmatpush1.xpose.msra.mxu0 %v3083
  %3104 = vmatprep.subr.mxu0 0.0
  %3105 = vmatpush1.xpose.msra.mxu0 %v3086
  %3106 = vmatprep.subr.mxu0 0.0
  %3107 = vmatpush1.xpose.msra.mxu0 %v3089
  %3108 = vmatprep.subr.mxu0 0.0
  %3109 = vmatpush1.xpose.msra.mxu0 %v3092
  %3110 = vmatprep.subr.mxu0 0.0
  %3111 = vmatpush1.xpose.msra.mxu0 0.0
  %3112 = vmatprep.subr.mxu0 0.0
  %3113 = vmatpush1.xpose.msra.mxu0 0.0
  %3114 = vmatprep.subr.mxu0 0.0
  %3115 = vmatpush1.xpose.msra.mxu0 0.0
  %3116 = vmatprep.subr.mxu0 0.0
  %3117 = vmatpush1.xpose.msra.mxu0 0.0
  %3118 = vmatprep.subr.mxu0 0.0
  %3119 = vmatpush1.xpose.msra.mxu0 0.0
  %3120 = vmatprep.subr.mxu0 0.0
  %3121 = vmatpush1.xpose.msra.mxu0 0.0
  %3122 = vmatprep.subr.mxu0 0.0
  %3123 = vmatpush1.xpose.msra.mxu0 0.0
  %3124 = vmatprep.subr.mxu0 0.0
  %3125 = vmatpush1.xpose.msra.mxu0 0.0
  %3126 = vmatprep.subr.mxu0 0.0
  %3127 = vmatpush1.xpose.msra.mxu0 0.0
  %3128 = vmatprep.subr.mxu0 0.0
  %3129 = vmatpush1.xpose.msra.mxu0 0.0
  %3130 = vmatprep.subr.mxu0 0.0
  %3131 = vmatpush1.xpose.msra.mxu0 0.0
  %3132 = vmatprep.subr.mxu0 0.0
  %3133 = vmatpush1.xpose.msra.mxu0 0.0
  %3134 = vmatprep.subr.mxu0 0.0
  %3135 = vmatpush1.xpose.msra.mxu0 0.0
  %3136 = vmatprep.subr.mxu0 0.0
  %3137 = vmatpush1.xpose.msra.mxu0 0.0
  %3138 = vmatprep.subr.mxu0 0.0
  %3139 = vmatpush1.xpose.msra.mxu0 0.0
  %3140 = vmatprep.subr.mxu0 0.0
  %3141 = vmatpush1.xpose.msra.mxu0 0.0
  %3142 = vmatprep.subr.mxu0 0.0
  %3143 = vmatpush1.xpose.msra.mxu0 0.0
  %3144 = vmatprep.subr.mxu0 0.0
  %3145 = vmatpush1.xpose.msra.mxu0 0.0
  %3146 = vmatprep.subr.mxu0 0.0
  %3147 = vmatpush1.xpose.msra.mxu0 0.0
  %3148 = vmatprep.subr.mxu0 0.0
  %3149 = vmatpush1.xpose.msra.mxu0 0.0
  %3150 = vmatprep.subr.mxu0 0.0
  %3151 = vmatpush1.xpose.msra.mxu0 0.0
  %3152 = vmatprep.subr.mxu0 0.0
  %3153 = vmatpush1.xpose.msra.mxu0 0.0
  %3154 = vmatprep.subr.mxu0 0.0
  %3155 = vmatpush1.xpose.msra.mxu0 0.0
  %3156 = vmatprep.subr.mxu0 0.0
  %3157 = vmatpush1.xpose.msra.mxu0 0.0
  %3158 = vmatprep.mubr.f32.mxu0 0.0
  %3159 = vmatmul.mubr.f32.gmra.mrb[0].mxu0 %v3068
  %v3160 = vpop.f32.mrb[0].mxu0
  %v3161 = vadd.f32 0.0, %v3160
  %v3162 = vpop.f32.mrb[0].mxu0
  %3163 = vdwg.mxu0
  %3164 = vst.msk [vmem:[%s3] sm:$0xff] %vm1683, %v2482
  %3165 = vst.msk [vmem:[%s3 + $0x8] sm:$0xff] %vm1683, %v2579
  %3166 = vst.msk [vmem:[%s3 + $0x10] sm:$0xff] %vm1683, %v2676
  %3167 = vst.msk [vmem:[%s3 + $0x18] sm:$0xff] %vm1683, %v2773
  %3168 = vst.msk [vmem:[%s3 + $0x20] sm:$0xff] %vm1683, %v2870
  %3169 = vst.msk [vmem:[%s3 + $0x28] sm:$0xff] %vm1683, %v2967
  %3170 = vst.msk [vmem:[%s3 + $0x30] sm:$0xff] %vm1683, %v3064
  %3171 = vst.msk [vmem:[%s3 + $0x38] sm:$0xff] %vm1683, %v3161
  // Predicated region
  $region14: #{transformer_forward.1} parent=0 // pred_check
    _
  $region15: #{transformer_forward.1} parent=0 // pred_check_branch
    %3173 = sbr.rel (0) target = $region17
  $region16: #{transformer_forward.1} parent=0 // pred_region
    _
  $region17: #{transformer_forward.1} parent=0 // pred_fallthru
    _
  // Predicated region
  $region18: #{transformer_forward.1} parent=0 // pred_check
    _
  $region19: #{transformer_forward.1} parent=0 // pred_check_branch
    %3175 = sbr.rel (0) target = $region21
  $region20: #{transformer_forward.1} parent=0 // pred_region
    _
  $region21: #{transformer_forward.1} parent=0 // pred_fallthru
    _

</llo_original>
